<compile_context>
chip_gen: v6e
topology: v6e:2x2x1
jax: 0.10.0
libtpu: 0.0.40
codegen_flags: <defaults>
</compile_context>

<pallas_src>
import functools
import math

import jax
import jax.numpy as jnp
import numpy as np
from jax.experimental import pallas as pl
from jax.experimental.pallas import tpu as pltpu


def _silu(x):
    return x * jax.nn.sigmoid(x)


# --------------------------------------------------------------------------
# Kernel 1: edge_mlp + node_mlp  ->  h_new tile
# --------------------------------------------------------------------------
def _node_kernel(hf_ref, ht_ref, e_ref, mt_ref, mc_ref,
                 we_s_ref, we_t_ref, we_e_ref, be1_ref, we2_ref, be2_ref,
                 wn1h_ref, wn1a_ref, bn1_ref, wn2_ref, bn2_ref,
                 out_ref, *, residual):
    h_all = hf_ref[0]            # (Np, F)  pre-masked h (all source nodes j)
    h_tile = ht_ref[0]           # (T, F)   target nodes i of this tile
    e = e_ref[0]                 # (T, Np, E) pre-masked edge_attr
    m_tile = mt_ref[0]           # (T, 1)
    m_col = mc_ref[0]            # (1, Np)
    T, Np, E = e.shape
    H = we2_ref.shape[0]

    # edge_mlp layer 1, decomposed over the concat [source_j, target_i, edge_ij]
    src = jnp.dot(h_all, we_s_ref[...], preferred_element_type=jnp.float32)    # (Np, H)
    tgt = jnp.dot(h_tile, we_t_ref[...], preferred_element_type=jnp.float32)   # (T, H)
    ec = jnp.dot(e.reshape(T * Np, E), we_e_ref[...],
                 preferred_element_type=jnp.float32).reshape(T, Np, H)
    m1 = _silu(src[None, :, :] + tgt[:, None, :] + ec + be1_ref[...])          # (T, Np, H)
    # edge_mlp layer 2
    m2 = _silu(jnp.dot(m1.reshape(T * Np, H), we2_ref[...],
                       preferred_element_type=jnp.float32) + be2_ref[...])
    edge_feat = m2.reshape(T, Np, H)
    # attention: softmax over a singleton dim == 1.0 -> numerical no-op.
    mask2d = m_tile * m_col                                                    # (T, Np)
    edge_feat = edge_feat * mask2d[:, :, None]

    agg = jnp.sum(edge_feat, axis=1)                                           # (T, H)

    # node_mlp on masked concat [h, agg] (concat decomposed into two matmuls)
    h_m = h_tile * m_tile
    agg_m = agg * m_tile
    n1 = _silu(jnp.dot(h_m, wn1h_ref[...], preferred_element_type=jnp.float32)
               + jnp.dot(agg_m, wn1a_ref[...], preferred_element_type=jnp.float32)
               + bn1_ref[...])
    out = jnp.dot(n1, wn2_ref[...], preferred_element_type=jnp.float32) + bn2_ref[...]
    if residual:
        out = h_tile + out
    out_ref[0] = (out * m_tile).astype(out_ref.dtype)


# --------------------------------------------------------------------------
# Kernel 2: coord_mlp (on updated h) + coord aggregation  ->  coord tile
# --------------------------------------------------------------------------
def _coord_kernel(hf_ref, ht_ref, cf_ref, ct_ref, e_ref, mt_ref, mc_ref,
                  wc_s_ref, wc_t_ref, wc_e_ref, bc1_ref, wc2_ref, bc2_ref,
                  wc3_ref, out_ref, *, norm_constant):
    h_all = hf_ref[0]            # (Np, F)  updated, masked h
    h_tile = ht_ref[0]           # (T, F)
    c_all = cf_ref[0]            # (Np, D)  masked coord
    c_tile = ct_ref[0]           # (T, D)
    e = e_ref[0]                 # (T, Np, E)
    m_tile = mt_ref[0]           # (T, 1)
    m_col = mc_ref[0]            # (1, Np)
    T, Np, E = e.shape
    H = wc2_ref.shape[0]

    src = jnp.dot(h_all, wc_s_ref[...], preferred_element_type=jnp.float32)    # (Np, H)
    tgt = jnp.dot(h_tile, wc_t_ref[...], preferred_element_type=jnp.float32)   # (T, H)
    ec = jnp.dot(e.reshape(T * Np, E), wc_e_ref[...],
                 preferred_element_type=jnp.float32).reshape(T, Np, H)
    c1 = _silu(src[None, :, :] + tgt[:, None, :] + ec + bc1_ref[...])          # (T, Np, H)
    c2 = _silu(jnp.dot(c1.reshape(T * Np, H), wc2_ref[...],
                       preferred_element_type=jnp.float32) + bc2_ref[...])     # (T*Np, H)
    # final Linear(H, 1, bias=False) as a lane reduction (avoids a width-1 matmul)
    s = jnp.sum(c2 * wc3_ref[...], axis=-1, keepdims=True).reshape(T, Np, 1)

    # coord2radial: diff / (||diff|| + norm_constant)
    diff = c_tile[:, None, :] - c_all[None, :, :]                              # (T, Np, D)
    radial = jnp.sum(diff * diff, axis=-1, keepdims=True)                      # (T, Np, 1)
    diff = diff / (jnp.sqrt(radial) + norm_constant)

    mask2d = m_tile * m_col                                                    # (T, Np)
    trans = diff * s * mask2d[:, :, None]                                      # (T, Np, D)
    agg = jnp.sum(trans, axis=1)                                               # (T, D)
    out_ref[0] = ((c_tile + agg) * m_tile).astype(out_ref.dtype)


# --------------------------------------------------------------------------
# Wrapper = E_GCL.forward
# --------------------------------------------------------------------------
def egcl_forward(params, h, coord, mask=None, edge_attr=None, *,
                 norm_constant=1.0, residual=True, tile_i=None):
    assert edge_attr is not None, "forward masks edge_attr in place -> required"
    h = jnp.asarray(h, jnp.float32)
    coord = jnp.asarray(coord, jnp.float32)
    B, N, F = h.shape
    D = coord.shape[-1]
    E = edge_attr.shape[-1]
    edge_attr = jnp.asarray(edge_attr, jnp.float32).reshape(B, N, N, E)
    if mask is None:
        mask = jnp.ones((B, N), jnp.float32)
    mask = jnp.asarray(mask, jnp.float32)

    H = params["w_e2"].shape[0]
    F_out = params["w_n2"].shape[1]
    assert F_out == F, "residual connection requires output_nf == input_nf"

    # Pre-masking exactly as in E_GCL.forward (the masked edge_attr is returned).
    h = h * mask[..., None]
    coord = coord * mask[..., None]
    mask2d = mask[:, :, None] * mask[:, None, :]
    edge_attr = edge_attr * mask2d[..., None]
    # `radial` from coord2radial is never consumed by the module -> skipped.

    # Pad the node axis to a multiple of 8 sublanes; padded nodes get mask = 0
    # so they contribute nothing and are sliced off at the end.
    Np8 = ((N + 7) // 8) * 8
    if tile_i is None:
        # Default: one target tile per graph (molecular graphs are small);
        # keeps the per-batch source projection computed exactly once.
        tile_i = Np8 if Np8 <= 256 else 8
    tile_i = max(8, (int(tile_i) // 8) * 8)
    Np = ((N + tile_i - 1) // tile_i) * tile_i
    pad = Np - N
    if pad:
        h_p = jnp.pad(h, ((0, 0), (0, pad), (0, 0)))
        coord_p = jnp.pad(coord, ((0, 0), (0, pad), (0, 0)))
        edge_p = jnp.pad(edge_attr, ((0, 0), (0, pad), (0, pad), (0, 0)))
        mask_p = jnp.pad(mask, ((0, 0), (0, pad)))
    else:
        h_p, coord_p, edge_p, mask_p = h, coord, edge_attr, mask

    m_row = mask_p[:, :, None]        # (B, Np, 1) -> per-target-tile mask
    m_col = mask_p[:, None, :]        # (B, 1, Np) -> per-source mask

    # Split concatenated-input weights so the kernels never materialize the
    # [source, target, edge_attr] concat.
    w_e1 = params["w_e1"]
    we_s, we_t, we_e = w_e1[:F], w_e1[F:2 * F], w_e1[2 * F:]
    w_n1 = params["w_n1"]
    wn1_h, wn1_a = w_n1[:F], w_n1[F:]
    w_c1 = params["w_c1"]
    wc_s, wc_t, wc_e = w_c1[:F_out], w_c1[F_out:2 * F_out], w_c1[2 * F_out:]
    wc3_row = params["w_c3"].reshape(1, H)

    grid = (B, Np // tile_i)
    dimsem = ("parallel", "parallel")

    def const_spec(shape):
        return pl.BlockSpec(shape, lambda b, i: (0,) * len(shape))

    # ---------------- node update ----------------
    h_new = pl.pallas_call(
        functools.partial(_node_kernel, residual=bool(residual)),
        out_shape=jax.ShapeDtypeStruct((B, Np, F_out), jnp.float32),
        grid_spec=pltpu.PrefetchScalarGridSpec(
            num_scalar_prefetch=0,
            grid=grid,
            in_specs=[
                pl.BlockSpec((1, Np, F), lambda b, i: (b, 0, 0)),            # h (all j)
                pl.BlockSpec((1, tile_i, F), lambda b, i: (b, i, 0)),        # h tile (i)
                pl.BlockSpec((1, tile_i, Np, E), lambda b, i: (b, i, 0, 0)), # edge_attr tile
                pl.BlockSpec((1, tile_i, 1), lambda b, i: (b, i, 0)),        # mask (i)
                pl.BlockSpec((1, 1, Np), lambda b, i: (b, 0, 0)),            # mask (j)
                const_spec((F, H)), const_spec((F, H)), const_spec((E, H)),
                const_spec((1, H)), const_spec((H, H)), const_spec((1, H)),
                const_spec((F, H)), const_spec((H, H)), const_spec((1, H)),
                const_spec((H, F_out)), const_spec((1, F_out)),
            ],
            out_specs=pl.BlockSpec((1, tile_i, F_out), lambda b, i: (b, i, 0)),
        ),
        compiler_params=pltpu.CompilerParams(dimension_semantics=dimsem),
    )(h_p, h_p, edge_p, m_row, m_col,
      we_s, we_t, we_e, params["b_e1"], params["w_e2"], params["b_e2"],
      wn1_h, wn1_a, params["b_n1"], params["w_n2"], params["b_n2"])

    # ---------------- coord update (uses updated h) ----------------
    coord_new = pl.pallas_call(
        functools.partial(_coord_kernel, norm_constant=float(norm_constant)),
        out_shape=jax.ShapeDtypeStruct((B, Np, D), jnp.float32),
        grid_spec=pltpu.PrefetchScalarGridSpec(
            num_scalar_prefetch=0,
            grid=grid,
            in_specs=[
                pl.BlockSpec((1, Np, F_out), lambda b, i: (b, 0, 0)),        # h_new (all j)
                pl.BlockSpec((1, tile_i, F_out), lambda b, i: (b, i, 0)),    # h_new tile (i)
                pl.BlockSpec((1, Np, D), lambda b, i: (b, 0, 0)),            # coord (all j)
                pl.BlockSpec((1, tile_i, D), lambda b, i: (b, i, 0)),        # coord tile (i)
                pl.BlockSpec((1, tile_i, Np, E), lambda b, i: (b, i, 0, 0)), # edge_attr tile
                pl.BlockSpec((1, tile_i, 1), lambda b, i: (b, i, 0)),        # mask (i)
                pl.BlockSpec((1, 1, Np), lambda b, i: (b, 0, 0)),            # mask (j)
                const_spec((F_out, H)), const_spec((F_out, H)), const_spec((E, H)),
                const_spec((1, H)), const_spec((H, H)), const_spec((1, H)),
                const_spec((1, H)),
            ],
            out_specs=pl.BlockSpec((1, tile_i, D), lambda b, i: (b, i, 0)),
        ),
        compiler_params=pltpu.CompilerParams(dimension_semantics=dimsem),
    )(h_new, h_new, coord_p, coord_p, edge_p, m_row, m_col,
      wc_s, wc_t, wc_e, params["b_c1"], params["w_c2"], params["b_c2"], wc3_row)

    return h_new[:, :N], coord_new[:, :N], edge_attr


# --------------------------------------------------------------------------
# Pure-JAX reference (mirrors the PyTorch E_GCL.forward)
# --------------------------------------------------------------------------
def egcl_reference(params, h, coord, mask, edge_attr, norm_constant=1.0):
    B, N, F = h.shape
    mask = mask.astype(jnp.float32)
    h = h * mask[..., None]
    coord = coord * mask[..., None]
    mask2d = mask[:, :, None] * mask[:, None, :]

    coord_diff = coord[:, :, None, :] - coord[:, None, :, :]
    radial = jnp.sum(coord_diff ** 2, axis=-1, keepdims=True)
    coord_diff = coord_diff / (jnp.sqrt(radial) + norm_constant)
    coord_diff = coord_diff * mask2d[..., None]
    edge_attr = edge_attr * mask2d[..., None]

    def silu(x):
        return x * jax.nn.sigmoid(x)

    def dot(a, b):
        return jnp.dot(a, b, precision="highest")

    # edge model
    source = jnp.broadcast_to(h[:, None, :, :], (B, N, N, F))   # h[b, j]
    target = jnp.broadcast_to(h[:, :, None, :], (B, N, N, F))   # h[b, i]
    ein = jnp.concatenate([source, target, edge_attr], axis=-1)
    x = silu(dot(ein, params["w_e1"]) + params["b_e1"])
    edge_feat = silu(dot(x, params["w_e2"]) + params["b_e2"])
    # attention: softmax over singleton dim == 1 -> no-op
    edge_feat = edge_feat * mask2d[..., None]

    # node model
    agg = jnp.sum(edge_feat, axis=2)
    nin = jnp.concatenate([h, agg], axis=-1) * mask[..., None]
    out = dot(silu(dot(nin, params["w_n1"]) + params["b_n1"]), params["w_n2"]) + params["b_n2"]
    h_new = (h + out) * mask[..., None]

    # coord model (uses updated h)
    source = jnp.broadcast_to(h_new[:, None, :, :], (B, N, N, F))
    target = jnp.broadcast_to(h_new[:, :, None, :], (B, N, N, F))
    cin = jnp.concatenate([source, target, edge_attr], axis=-1)
    y = silu(dot(cin, params["w_c1"]) + params["b_c1"])
    y = silu(dot(y, params["w_c2"]) + params["b_c2"])
    s = dot(y, params["w_c3"])
    trans = mask2d[..., None] * (coord_diff * s)
    agg_c = jnp.sum(trans, axis=2)
    coord_new = (coord + agg_c) * mask[..., None]
    return h_new, coord_new, edge_attr


if __name__ == "__main__":
    B, N, F, H, E, D = 2, 8, 32, 32, 8, 3

    key = jax.random.PRNGKey(0)
    ks = jax.random.split(key, 16)

    def lin_w(k, fin, fout, scale=None):
        s = (1.0 / math.sqrt(fin)) if scale is None else scale
        return jax.random.uniform(k, (fin, fout), jnp.float32, -s, s)

    params = {
        "w_e1": lin_w(ks[0], 2 * F + E, H), "b_e1": lin_w(ks[1], 1, H),
        "w_e2": lin_w(ks[2], H, H),         "b_e2": lin_w(ks[3], 1, H),
        "w_n1": lin_w(ks[4], F + H, H),     "b_n1": lin_w(ks[5], 1, H),
        "w_n2": lin_w(ks[6], H, F),         "b_n2": lin_w(ks[7], 1, F),
        "w_c1": lin_w(ks[8], 2 * F + E, H), "b_c1": lin_w(ks[9], 1, H),
        "w_c2": lin_w(ks[10], H, H),        "b_c2": lin_w(ks[11], 1, H),
        # final coord layer: Linear(hidden, 1, bias=False), xavier gain=0.001
        "w_c3": lin_w(ks[12], H, 1, scale=0.001),
    }

    h = jax.random.normal(ks[13], (B, N, F), jnp.float32)
    coord = jax.random.normal(ks[14], (B, N, D), jnp.float32)
    edge_attr = jax.random.normal(ks[15], (B, N, N, E), jnp.float32)
    # Second graph has 2 masked-out nodes to exercise the masking path.
    lengths = jnp.array([N, N - 2])
    mask = (jnp.arange(N)[None, :] < lengths[:, None]).astype(jnp.float32)

    h_out, c_out, e_out = egcl_forward(params, h, coord, mask, edge_attr,
                                       norm_constant=1.0)
    jax.block_until_ready((h_out, c_out, e_out))

    h_ref, c_ref, e_ref = egcl_reference(params, h, coord, mask, edge_attr, 1.0)

    assert h_out.shape == (B, N, F)
    assert c_out.shape == (B, N, D)
    assert e_out.shape == (B, N, N, E)
    np.testing.assert_allclose(np.asarray(h_out), np.asarray(h_ref), atol=2e-3, rtol=2e-3)
    np.testing.assert_allclose(np.asarray(c_out), np.asarray(c_ref), atol=2e-3, rtol=2e-3)
    np.testing.assert_allclose(np.asarray(e_out), np.asarray(e_ref), atol=1e-5, rtol=1e-5)

    print("KERNEL_OK")
</pallas_src>

<mosaic_0001>
module attributes {stable_mosaic.version = 11 : i64} {
  func.func @_node_kernel(%arg0: i32, %arg1: i32, %arg2: memref<1x8x32xf32, #tpu.memory_space<vmem>>, %arg3: memref<1x8x32xf32, #tpu.memory_space<vmem>>, %arg4: memref<1x8x8x8xf32, #tpu.memory_space<vmem>>, %arg5: memref<1x8x1xf32, #tpu.memory_space<vmem>>, %arg6: memref<1x1x8xf32, #tpu.memory_space<vmem>>, %arg7: memref<32x32xf32, #tpu.memory_space<vmem>>, %arg8: memref<32x32xf32, #tpu.memory_space<vmem>>, %arg9: memref<8x32xf32, #tpu.memory_space<vmem>>, %arg10: memref<1x32xf32, #tpu.memory_space<vmem>>, %arg11: memref<32x32xf32, #tpu.memory_space<vmem>>, %arg12: memref<1x32xf32, #tpu.memory_space<vmem>>, %arg13: memref<32x32xf32, #tpu.memory_space<vmem>>, %arg14: memref<32x32xf32, #tpu.memory_space<vmem>>, %arg15: memref<1x32xf32, #tpu.memory_space<vmem>>, %arg16: memref<32x32xf32, #tpu.memory_space<vmem>>, %arg17: memref<1x32xf32, #tpu.memory_space<vmem>>, %arg18: memref<1x8x32xf32, #tpu.memory_space<vmem>>) attributes {dimension_semantics = [#tpu.dimension_semantics<parallel>, #tpu.dimension_semantics<parallel>], iteration_bounds = array<i64: 2, 1>, scalar_prefetch = 0 : i64, scratch_operands = 0 : i64, tpu.core_type = #tpu.core_type<tc>, window_params = [{transform_indices = @transform_0, window_bounds = array<i64: 1, 8, 32>}, {transform_indices = @transform_1, window_bounds = array<i64: 1, 8, 32>}, {transform_indices = @transform_2, window_bounds = array<i64: 1, 8, 8, 8>}, {transform_indices = @transform_3, window_bounds = array<i64: 1, 8, 1>}, {transform_indices = @transform_4, window_bounds = array<i64: 1, 1, 8>}, {pipeline_mode = #tpu.pipeline_mode<synchronous>, transform_indices = @transform_5, window_bounds = array<i64: 32, 32>}, {pipeline_mode = #tpu.pipeline_mode<synchronous>, transform_indices = @transform_6, window_bounds = array<i64: 32, 32>}, {pipeline_mode = #tpu.pipeline_mode<synchronous>, transform_indices = @transform_7, window_bounds = array<i64: 8, 32>}, {pipeline_mode = #tpu.pipeline_mode<synchronous>, transform_indices = @transform_8, window_bounds = array<i64: 1, 32>}, {pipeline_mode = #tpu.pipeline_mode<synchronous>, transform_indices = @transform_9, window_bounds = array<i64: 32, 32>}, {pipeline_mode = #tpu.pipeline_mode<synchronous>, transform_indices = @transform_10, window_bounds = array<i64: 1, 32>}, {pipeline_mode = #tpu.pipeline_mode<synchronous>, transform_indices = @transform_11, window_bounds = array<i64: 32, 32>}, {pipeline_mode = #tpu.pipeline_mode<synchronous>, transform_indices = @transform_12, window_bounds = array<i64: 32, 32>}, {pipeline_mode = #tpu.pipeline_mode<synchronous>, transform_indices = @transform_13, window_bounds = array<i64: 1, 32>}, {pipeline_mode = #tpu.pipeline_mode<synchronous>, transform_indices = @transform_14, window_bounds = array<i64: 32, 32>}, {pipeline_mode = #tpu.pipeline_mode<synchronous>, transform_indices = @transform_15, window_bounds = array<i64: 1, 32>}, {transform_indices = @transform_16, window_bounds = array<i64: 1, 8, 32>}]} {
    %c0 = arith.constant 0 : index
    %c0_0 = arith.constant 0 : index
    %c0_1 = arith.constant 0 : index
    %0 = vector.load %arg2[%c0, %c0_0, %c0_1] : memref<1x8x32xf32, #tpu.memory_space<vmem>>, vector<1x8x32xf32>
    %1 = vector.shape_cast %0 : vector<1x8x32xf32> to vector<8x32xf32>
    %c0_2 = arith.constant 0 : index
    %c0_3 = arith.constant 0 : index
    %c0_4 = arith.constant 0 : index
    %2 = vector.load %arg3[%c0_2, %c0_3, %c0_4] : memref<1x8x32xf32, #tpu.memory_space<vmem>>, vector<1x8x32xf32>
    %3 = vector.shape_cast %2 : vector<1x8x32xf32> to vector<8x32xf32>
    %c0_5 = arith.constant 0 : index
    %c0_6 = arith.constant 0 : index
    %c0_7 = arith.constant 0 : index
    %c0_8 = arith.constant 0 : index
    %4 = vector.load %arg4[%c0_5, %c0_6, %c0_7, %c0_8] : memref<1x8x8x8xf32, #tpu.memory_space<vmem>>, vector<1x8x8x8xf32>
    %5 = vector.shape_cast %4 : vector<1x8x8x8xf32> to vector<8x8x8xf32>
    %c0_9 = arith.constant 0 : index
    %c0_10 = arith.constant 0 : index
    %c0_11 = arith.constant 0 : index
    %6 = vector.load %arg5[%c0_9, %c0_10, %c0_11] : memref<1x8x1xf32, #tpu.memory_space<vmem>>, vector<1x8x1xf32>
    %7 = vector.shape_cast %6 : vector<1x8x1xf32> to vector<8x1xf32>
    %c0_12 = arith.constant 0 : index
    %c0_13 = arith.constant 0 : index
    %c0_14 = arith.constant 0 : index
    %8 = vector.load %arg6[%c0_12, %c0_13, %c0_14] : memref<1x1x8xf32, #tpu.memory_space<vmem>>, vector<1x1x8xf32>
    %9 = vector.shape_cast %8 : vector<1x1x8xf32> to vector<1x8xf32>
    %c0_15 = arith.constant 0 : index
    %c0_16 = arith.constant 0 : index
    %10 = vector.load %arg7[%c0_15, %c0_16] : memref<32x32xf32, #tpu.memory_space<vmem>>, vector<32x32xf32>
    %cst = arith.constant dense<0.000000e+00> : vector<8x32xf32>
    %11 = tpu.matmul %1, %10, %cst {dimension_numbers = #tpu.dot_dimension_numbers<[1], [0], [0], [1], [0, 0, 1, 1], [], []>} : vector<8x32xf32>, vector<32x32xf32>, vector<8x32xf32> -> vector<8x32xf32>
    %c0_17 = arith.constant 0 : index
    %c0_18 = arith.constant 0 : index
    %12 = vector.load %arg8[%c0_17, %c0_18] : memref<32x32xf32, #tpu.memory_space<vmem>>, vector<32x32xf32>
    %cst_19 = arith.constant dense<0.000000e+00> : vector<8x32xf32>
    %13 = tpu.matmul %3, %12, %cst_19 {dimension_numbers = #tpu.dot_dimension_numbers<[1], [0], [0], [1], [0, 0, 1, 1], [], []>} : vector<8x32xf32>, vector<32x32xf32>, vector<8x32xf32> -> vector<8x32xf32>
    %14 = vector.shape_cast %5 : vector<8x8x8xf32> to vector<64x8xf32>
    %c0_20 = arith.constant 0 : index
    %c0_21 = arith.constant 0 : index
    %15 = vector.load %arg9[%c0_20, %c0_21] : memref<8x32xf32, #tpu.memory_space<vmem>>, vector<8x32xf32>
    %cst_22 = arith.constant dense<0.000000e+00> : vector<64x32xf32>
    %16 = tpu.matmul %14, %15, %cst_22 {dimension_numbers = #tpu.dot_dimension_numbers<[1], [0], [0], [1], [0, 0, 1, 1], [], []>} : vector<64x8xf32>, vector<8x32xf32>, vector<64x32xf32> -> vector<64x32xf32>
    %17 = vector.shape_cast %16 : vector<64x32xf32> to vector<8x8x32xf32>
    %18 = vector.shape_cast %11 : vector<8x32xf32> to vector<1x8x32xf32>
    %19 = vector.shape_cast %13 : vector<8x32xf32> to vector<8x1x32xf32>
    %20 = vector.broadcast %18 : vector<1x8x32xf32> to vector<8x8x32xf32>
    %21 = vector.broadcast %19 : vector<8x1x32xf32> to vector<8x8x32xf32>
    %22 = arith.addf %20, %21 : vector<8x8x32xf32>
    %23 = arith.addf %22, %17 : vector<8x8x32xf32>
    %c0_23 = arith.constant 0 : index
    %c0_24 = arith.constant 0 : index
    %24 = vector.load %arg10[%c0_23, %c0_24] : memref<1x32xf32, #tpu.memory_space<vmem>>, vector<1x32xf32>
    %25 = vector.shape_cast %24 : vector<1x32xf32> to vector<1x1x32xf32>
    %26 = vector.broadcast %25 : vector<1x1x32xf32> to vector<8x8x32xf32>
    %27 = arith.addf %23, %26 : vector<8x8x32xf32>
    %28 = arith.negf %27 : vector<8x8x32xf32>
    %29 = math.exp %28 : vector<8x8x32xf32>
    %cst_25 = arith.constant 1.000000e+00 : f32
    %30 = vector.broadcast %cst_25 : f32 to vector<8x8x32xf32>
    %31 = arith.addf %30, %29 : vector<8x8x32xf32>
    %32 = arith.divf %30, %31 : vector<8x8x32xf32>
    %33 = arith.mulf %27, %32 : vector<8x8x32xf32>
    %34 = vector.shape_cast %33 : vector<8x8x32xf32> to vector<64x32xf32>
    %c0_26 = arith.constant 0 : index
    %c0_27 = arith.constant 0 : index
    %35 = vector.load %arg11[%c0_26, %c0_27] : memref<32x32xf32, #tpu.memory_space<vmem>>, vector<32x32xf32>
    %cst_28 = arith.constant dense<0.000000e+00> : vector<64x32xf32>
    %36 = tpu.matmul %34, %35, %cst_28 {dimension_numbers = #tpu.dot_dimension_numbers<[1], [0], [0], [1], [0, 0, 1, 1], [], []>} : vector<64x32xf32>, vector<32x32xf32>, vector<64x32xf32> -> vector<64x32xf32>
    %c0_29 = arith.constant 0 : index
    %c0_30 = arith.constant 0 : index
    %37 = vector.load %arg12[%c0_29, %c0_30] : memref<1x32xf32, #tpu.memory_space<vmem>>, vector<1x32xf32>
    %38 = vector.broadcast %37 : vector<1x32xf32> to vector<64x32xf32>
    %39 = arith.addf %36, %38 : vector<64x32xf32>
    %40 = arith.negf %39 : vector<64x32xf32>
    %41 = math.exp %40 : vector<64x32xf32>
    %cst_31 = arith.constant 1.000000e+00 : f32
    %42 = vector.broadcast %cst_31 : f32 to vector<64x32xf32>
    %43 = arith.addf %42, %41 : vector<64x32xf32>
    %44 = arith.divf %42, %43 : vector<64x32xf32>
    %45 = arith.mulf %39, %44 : vector<64x32xf32>
    %46 = vector.shape_cast %45 : vector<64x32xf32> to vector<8x8x32xf32>
    %47 = vector.broadcast %7 : vector<8x1xf32> to vector<8x8xf32>
    %48 = vector.broadcast %9 : vector<1x8xf32> to vector<8x8xf32>
    %49 = arith.mulf %47, %48 : vector<8x8xf32>
    %50 = vector.shape_cast %49 : vector<8x8xf32> to vector<8x8x1xf32>
    %51 = vector.broadcast %50 : vector<8x8x1xf32> to vector<8x8x32xf32>
    %52 = arith.mulf %46, %51 : vector<8x8x32xf32>
    %cst_32 = arith.constant dense<0.000000e+00> : vector<8x32xf32>
    %53 = vector.multi_reduction <add>, %52, %cst_32 [1] : vector<8x8x32xf32> to vector<8x32xf32>
    %54 = vector.broadcast %7 : vector<8x1xf32> to vector<8x32xf32>
    %55 = arith.mulf %3, %54 : vector<8x32xf32>
    %56 = vector.broadcast %7 : vector<8x1xf32> to vector<8x32xf32>
    %57 = arith.mulf %53, %56 : vector<8x32xf32>
    %c0_33 = arith.constant 0 : index
    %c0_34 = arith.constant 0 : index
    %58 = vector.load %arg13[%c0_33, %c0_34] : memref<32x32xf32, #tpu.memory_space<vmem>>, vector<32x32xf32>
    %cst_35 = arith.constant dense<0.000000e+00> : vector<8x32xf32>
    %59 = tpu.matmul %55, %58, %cst_35 {dimension_numbers = #tpu.dot_dimension_numbers<[1], [0], [0], [1], [0, 0, 1, 1], [], []>} : vector<8x32xf32>, vector<32x32xf32>, vector<8x32xf32> -> vector<8x32xf32>
    %c0_36 = arith.constant 0 : index
    %c0_37 = arith.constant 0 : index
    %60 = vector.load %arg14[%c0_36, %c0_37] : memref<32x32xf32, #tpu.memory_space<vmem>>, vector<32x32xf32>
    %cst_38 = arith.constant dense<0.000000e+00> : vector<8x32xf32>
    %61 = tpu.matmul %57, %60, %cst_38 {dimension_numbers = #tpu.dot_dimension_numbers<[1], [0], [0], [1], [0, 0, 1, 1], [], []>} : vector<8x32xf32>, vector<32x32xf32>, vector<8x32xf32> -> vector<8x32xf32>
    %62 = arith.addf %59, %61 : vector<8x32xf32>
    %c0_39 = arith.constant 0 : index
    %c0_40 = arith.constant 0 : index
    %63 = vector.load %arg15[%c0_39, %c0_40] : memref<1x32xf32, #tpu.memory_space<vmem>>, vector<1x32xf32>
    %64 = vector.broadcast %63 : vector<1x32xf32> to vector<8x32xf32>
    %65 = arith.addf %62, %64 : vector<8x32xf32>
    %66 = arith.negf %65 : vector<8x32xf32>
    %67 = math.exp %66 : vector<8x32xf32>
    %cst_41 = arith.constant 1.000000e+00 : f32
    %68 = vector.broadcast %cst_41 : f32 to vector<8x32xf32>
    %69 = arith.addf %68, %67 : vector<8x32xf32>
    %70 = arith.divf %68, %69 : vector<8x32xf32>
    %71 = arith.mulf %65, %70 : vector<8x32xf32>
    %c0_42 = arith.constant 0 : index
    %c0_43 = arith.constant 0 : index
    %72 = vector.load %arg16[%c0_42, %c0_43] : memref<32x32xf32, #tpu.memory_space<vmem>>, vector<32x32xf32>
    %cst_44 = arith.constant dense<0.000000e+00> : vector<8x32xf32>
    %73 = tpu.matmul %71, %72, %cst_44 {dimension_numbers = #tpu.dot_dimension_numbers<[1], [0], [0], [1], [0, 0, 1, 1], [], []>} : vector<8x32xf32>, vector<32x32xf32>, vector<8x32xf32> -> vector<8x32xf32>
    %c0_45 = arith.constant 0 : index
    %c0_46 = arith.constant 0 : index
    %74 = vector.load %arg17[%c0_45, %c0_46] : memref<1x32xf32, #tpu.memory_space<vmem>>, vector<1x32xf32>
    %75 = vector.broadcast %74 : vector<1x32xf32> to vector<8x32xf32>
    %76 = arith.addf %73, %75 : vector<8x32xf32>
    %77 = arith.addf %3, %76 : vector<8x32xf32>
    %78 = vector.broadcast %7 : vector<8x1xf32> to vector<8x32xf32>
    %79 = arith.mulf %77, %78 : vector<8x32xf32>
    %c0_47 = arith.constant 0 : index
    %c0_48 = arith.constant 0 : index
    %c0_49 = arith.constant 0 : index
    %80 = vector.load %arg18[%c0_47, %c0_48, %c0_49] : memref<1x8x32xf32, #tpu.memory_space<vmem>>, vector<1x8x32xf32>
    %81 = vector.shape_cast %80 : vector<1x8x32xf32> to vector<8x32xf32>
    %82 = vector.shape_cast %79 : vector<8x32xf32> to vector<1x8x32xf32>
    tpu.vector_store %arg18[%c0_47, %c0_48, %c0_49], %82 {strides = array<i32>} : memref<1x8x32xf32, #tpu.memory_space<vmem>>, vector<1x8x32xf32>,
    return
  }
  func.func @transform_0(%arg0: i32, %arg1: i32) -> (i32, i32, i32) {
    %c0_i32 = arith.constant 0 : i32
    %c0_i32_0 = arith.constant 0 : i32
    %c0_i32_1 = arith.constant 0 : i32
    return %arg0, %c0_i32, %c0_i32_0 : i32, i32, i32
  }
  func.func @transform_1(%arg0: i32, %arg1: i32) -> (i32, i32, i32) {
    %c0_i32 = arith.constant 0 : i32
    %c0_i32_0 = arith.constant 0 : i32
    return %arg0, %arg1, %c0_i32 : i32, i32, i32
  }
  func.func @transform_2(%arg0: i32, %arg1: i32) -> (i32, i32, i32, i32) {
    %c0_i32 = arith.constant 0 : i32
    %c0_i32_0 = arith.constant 0 : i32
    %c0_i32_1 = arith.constant 0 : i32
    return %arg0, %arg1, %c0_i32, %c0_i32_0 : i32, i32, i32, i32
  }
  func.func @transform_3(%arg0: i32, %arg1: i32) -> (i32, i32, i32) {
    %c0_i32 = arith.constant 0 : i32
    %c0_i32_0 = arith.constant 0 : i32
    return %arg0, %arg1, %c0_i32 : i32, i32, i32
  }
  func.func @transform_4(%arg0: i32, %arg1: i32) -> (i32, i32, i32) {
    %c0_i32 = arith.constant 0 : i32
    %c0_i32_0 = arith.constant 0 : i32
    %c0_i32_1 = arith.constant 0 : i32
    return %arg0, %c0_i32, %c0_i32_0 : i32, i32, i32
  }
  func.func @transform_5(%arg0: i32, %arg1: i32) -> (i32, i32) {
    %c0_i32 = arith.constant 0 : i32
    %c0_i32_0 = arith.constant 0 : i32
    %c0_i32_1 = arith.constant 0 : i32
    return %c0_i32, %c0_i32_0 : i32, i32
  }
  func.func @transform_6(%arg0: i32, %arg1: i32) -> (i32, i32) {
    %c0_i32 = arith.constant 0 : i32
    %c0_i32_0 = arith.constant 0 : i32
    %c0_i32_1 = arith.constant 0 : i32
    return %c0_i32, %c0_i32_0 : i32, i32
  }
  func.func @transform_7(%arg0: i32, %arg1: i32) -> (i32, i32) {
    %c0_i32 = arith.constant 0 : i32
    %c0_i32_0 = arith.constant 0 : i32
    %c0_i32_1 = arith.constant 0 : i32
    return %c0_i32, %c0_i32_0 : i32, i32
  }
  func.func @transform_8(%arg0: i32, %arg1: i32) -> (i32, i32) {
    %c0_i32 = arith.constant 0 : i32
    %c0_i32_0 = arith.constant 0 : i32
    %c0_i32_1 = arith.constant 0 : i32
    return %c0_i32, %c0_i32_0 : i32, i32
  }
  func.func @transform_9(%arg0: i32, %arg1: i32) -> (i32, i32) {
    %c0_i32 = arith.constant 0 : i32
    %c0_i32_0 = arith.constant 0 : i32
    %c0_i32_1 = arith.constant 0 : i32
    return %c0_i32, %c0_i32_0 : i32, i32
  }
  func.func @transform_10(%arg0: i32, %arg1: i32) -> (i32, i32) {
    %c0_i32 = arith.constant 0 : i32
    %c0_i32_0 = arith.constant 0 : i32
    %c0_i32_1 = arith.constant 0 : i32
    return %c0_i32, %c0_i32_0 : i32, i32
  }
  func.func @transform_11(%arg0: i32, %arg1: i32) -> (i32, i32) {
    %c0_i32 = arith.constant 0 : i32
    %c0_i32_0 = arith.constant 0 : i32
    %c0_i32_1 = arith.constant 0 : i32
    return %c0_i32, %c0_i32_0 : i32, i32
  }
  func.func @transform_12(%arg0: i32, %arg1: i32) -> (i32, i32) {
    %c0_i32 = arith.constant 0 : i32
    %c0_i32_0 = arith.constant 0 : i32
    %c0_i32_1 = arith.constant 0 : i32
    return %c0_i32, %c0_i32_0 : i32, i32
  }
  func.func @transform_13(%arg0: i32, %arg1: i32) -> (i32, i32) {
    %c0_i32 = arith.constant 0 : i32
    %c0_i32_0 = arith.constant 0 : i32
    %c0_i32_1 = arith.constant 0 : i32
    return %c0_i32, %c0_i32_0 : i32, i32
  }
  func.func @transform_14(%arg0: i32, %arg1: i32) -> (i32, i32) {
    %c0_i32 = arith.constant 0 : i32
    %c0_i32_0 = arith.constant 0 : i32
    %c0_i32_1 = arith.constant 0 : i32
    return %c0_i32, %c0_i32_0 : i32, i32
  }
  func.func @transform_15(%arg0: i32, %arg1: i32) -> (i32, i32) {
    %c0_i32 = arith.constant 0 : i32
    %c0_i32_0 = arith.constant 0 : i32
    %c0_i32_1 = arith.constant 0 : i32
    return %c0_i32, %c0_i32_0 : i32, i32
  }
  func.func @transform_16(%arg0: i32, %arg1: i32) -> (i32, i32, i32) {
    %c0_i32 = arith.constant 0 : i32
    %c0_i32_0 = arith.constant 0 : i32
    return %arg0, %arg1, %c0_i32 : i32, i32, i32
  }
}

</mosaic_0001>

<llo_original>
// kernel: tpu_custom_call.1
$region0: #{tpu_custom_call.1}
  #allocation0 [shape = 'u32[]', space=smem, size = 0x4, offset = 0x4, fixed_abs, tag = 'smem constant byte address 0x4 - core index']
  #allocation1 [shape = 'u32[144,128]{1,0:T(1,128)}', space=vmem, size = 0x12000, scoped, tag = 'internal scratch']
  %s0 = inlined_call_operand.hbm [shape: f32[2,8,32], index: 0, kind: input, shape index: {}]
  %s1 = inlined_call_operand.hbm [shape: f32[2,8,32], index: 1, kind: input, shape index: {}]
  %s2 = inlined_call_operand.hbm [shape: f32[2,8,8,8], index: 2, kind: input, shape index: {}]
  %s3 = inlined_call_operand.vmem [shape: f32[2,8,1], index: 3, kind: input, shape index: {}]
  %s4 = inlined_call_operand.vmem [shape: f32[2,1,8], index: 4, kind: input, shape index: {}]
  %s5 = inlined_call_operand.hbm [shape: f32[32,32], index: 5, kind: input, shape index: {}]
  %s6 = inlined_call_operand.hbm [shape: f32[32,32], index: 6, kind: input, shape index: {}]
  %s7 = inlined_call_operand.hbm [shape: f32[8,32], index: 7, kind: input, shape index: {}]
  %s8 = inlined_call_operand.hbm [shape: f32[1,32], index: 8, kind: input, shape index: {}]
  %s9 = inlined_call_operand.vmem [shape: f32[32,32], index: 9, kind: input, shape index: {}]
  %s10 = inlined_call_operand.vmem [shape: f32[1,32], index: 10, kind: input, shape index: {}]
  %s11 = inlined_call_operand.hbm [shape: f32[32,32], index: 11, kind: input, shape index: {}]
  %s12 = inlined_call_operand.hbm [shape: f32[32,32], index: 12, kind: input, shape index: {}]
  %s13 = inlined_call_operand.vmem [shape: f32[1,32], index: 13, kind: input, shape index: {}]
  %s14 = inlined_call_operand.hbm [shape: f32[32,32], index: 14, kind: input, shape index: {}]
  %s15 = inlined_call_operand.vmem [shape: f32[1,32], index: 15, kind: input, shape index: {}]
  %s16 = inlined_call_operand.hbm [shape: f32[2,8,32], index: 16, kind: output, shape index: {}]
  %s17 = sld [smem:[#allocation0]]
  $region137: #{tpu_custom_call.1} parent=0
    _
  %s19 = ssub.s32 1, %s17
  %s20 = scalar_select 0, %s19, %s17
  $region1: #{tpu_custom_call.1} parent=0
    #allocation2 [shape = 'u8[8192]{0}', space=vmem, size = 0x2000, scoped, tag = 'input window, operand 0']
    #allocation3 [shape = 's32[2]{0}', space=sflag, size = 0x8, scoped, tag = 'scoped memory for tpu_custom_call.1']
    #allocation4 [shape = 's32[2]{0}', space=sflag, size = 0x8, scoped, tag = 'scoped memory for tpu_custom_call.1']
    #allocation5 [shape = 'u8[8192]{0}', space=vmem, size = 0x2000, scoped, tag = 'input window, operand 1']
    #allocation6 [shape = 's32[2]{0}', space=sflag, size = 0x8, scoped, tag = 'scoped memory for tpu_custom_call.1']
    #allocation7 [shape = 'u8[65536]{0}', space=vmem, size = 0x10000, scoped, tag = 'input window, operand 2']
    #allocation8 [shape = 'u8[16384]{0}', space=vmem, size = 0x4000, scoped, tag = 'input window, operand 5, single buffered']
    #allocation9 [shape = 's32[1]{0}', space=sflag, size = 0x4, scoped, tag = 'scoped memory for tpu_custom_call.1']
    #allocation10 [shape = 'u8[16384]{0}', space=vmem, size = 0x4000, scoped, tag = 'input window, operand 6, single buffered']
    #allocation11 [shape = 'u8[4096]{0}', space=vmem, size = 0x1000, scoped, tag = 'input window, operand 7, single buffered']
    #allocation12 [shape = 's32[1]{0}', space=sflag, size = 0x4, scoped, tag = 'scoped memory for tpu_custom_call.1']
    #allocation13 [shape = 'u8[512]{0}', space=vmem, size = 0x400, scoped, tag = 'input window, operand 8, single buffered']
    #allocation14 [shape = 'u8[16384]{0}', space=vmem, size = 0x4000, scoped, tag = 'input window, operand 11, single buffered']
    #allocation15 [shape = 's32[1]{0}', space=sflag, size = 0x4, scoped, tag = 'scoped memory for tpu_custom_call.1']
    #allocation16 [shape = 'u8[16384]{0}', space=vmem, size = 0x4000, scoped, tag = 'input window, operand 12, single buffered']
    #allocation17 [shape = 'u8[16384]{0}', space=vmem, size = 0x4000, scoped, tag = 'input window, operand 14, single buffered']
    #allocation18 [shape = 's32[1]{0}', space=sflag, size = 0x4, scoped, tag = 'scoped memory for tpu_custom_call.1']
    #allocation19 [shape = 'u8[8192]{0}', space=vmem, size = 0x2000, scoped, tag = 'output window, operand 0']
    %21 = vsyncpa [#allocation3], 0
    %s22 = scalar_lea.sflag [#allocation3], 1
    %23 = vsyncpa %s22, 0
    %24 = vsyncpa [#allocation6], 0
    %s25 = scalar_lea.sflag [#allocation6], 1
    %26 = vsyncpa %s25, 0
    %27 = vsyncpa [#allocation9], 0
    %28 = vsyncpa [#allocation12], 0
    %29 = vsyncpa [#allocation15], 0
    %30 = vsyncpa [#allocation18], 0
    %31 = vsyncpa [#allocation4], 0
    %s32 = scalar_lea.sflag [#allocation4], 1
    %33 = vsyncpa %s32, 0
    loop: start=0, step=1, limit=4
    $region2: #{tpu_custom_call.1} parent=1 // loop_pre_header
      _
    $region3: #{tpu_custom_call.1} parent=1 // loop_header
      %s35 = sphi 0, %s39
      %p36 = scmp.ge.s32.totalorder %s35, 4
      %s42 = sphi 0, %s54
      %s43 = sphi 0, %s50
      %s44 = sphi 0, %s42
      %s45 = sphi 0, %s43
      %s46 = sphi 0, %s44
      %s47 = sphi 0, %s45
      %s57 = sphi 0, %s59
      %s60 = sphi 0, %s57
      %s61 = sphi 0, %s60
      %s77 = sphi 0, %s61
      %s85 = sphi 0, %s87
      %s88 = sphi 0, %s85
      %s89 = sphi 0, %s88
      %s105 = sphi 0, %s89
      %s113 = sphi 0, %s115
      %s116 = sphi 0, %s113
      %s117 = sphi 0, %s116
      %s133 = sphi 0, %s117
      %s141 = sphi 0, %s143
      %s144 = sphi 0, %s141
      %s145 = sphi 0, %s144
      %s161 = sphi 0, %s145
      %s167 = sphi 0, %s169
      %s170 = sphi 0, %s167
      %s171 = sphi 0, %s170
      %s187 = sphi 0, %s171
      %s191 = sphi 0, %s191
      %s193 = sphi 0, %s191
      %s194 = sphi 0, %s193
      %s208 = sphi 0, %s194
      %s212 = sphi 0, %s212
      %s214 = sphi 0, %s212
      %s215 = sphi 0, %s214
      %s229 = sphi 0, %s215
      %s233 = sphi 0, %s233
      %s235 = sphi 0, %s233
      %s236 = sphi 0, %s235
      %s250 = sphi 0, %s236
      %s254 = sphi 0, %s254
      %s256 = sphi 0, %s254
      %s257 = sphi 0, %s256
      %s271 = sphi 0, %s257
      %s275 = sphi 0, %s275
      %s277 = sphi 0, %s275
      %s278 = sphi 0, %s277
      %s292 = sphi 0, %s278
      %s296 = sphi 0, %s296
      %s298 = sphi 0, %s296
      %s299 = sphi 0, %s298
      %s313 = sphi 0, %s299
      %s317 = sphi 0, %s317
      %s319 = sphi 0, %s317
      %s320 = sphi 0, %s319
      %s334 = sphi 0, %s320
      %s338 = sphi 0, %s338
      %s340 = sphi 0, %s338
      %s341 = sphi 0, %s340
      %s355 = sphi 0, %s341
      %s359 = sphi 0, %s359
      %s361 = sphi 0, %s359
      %s362 = sphi 0, %s361
      %s376 = sphi 0, %s362
      %s380 = sphi 0, %s380
      %s382 = sphi 0, %s380
      %s383 = sphi 0, %s382
      %s397 = sphi 0, %s383
      %s401 = sphi 0, %s401
      %s403 = sphi 0, %s401
      %s404 = sphi 0, %s403
      %s418 = sphi 0, %s404
      %s426 = sphi 0, %s428
      %s429 = sphi 0, %s426
      %s430 = sphi 0, %s429
      %s446 = sphi 0, %s430
    $region4: #{tpu_custom_call.1} parent=1 // loop_header_branch
      %38 = sbr.rel (%p36) target = $region8
    $region5: #{tpu_custom_call.1} parent=1 // loop_body
      %s40 = ssub.s32 %s35, 1
      %s41 = ssub.s32 %s35, 2
      %s48 = sadd.s32 1, %s43
      %p49 = scmp.ge.s32.totalorder %s48, 1
      %s50 = scalar_select %p49, 0, %s48
      %s51 = sadd.s32 1, %s42
      %s52 = scalar_select %p49, %s51, %s42
      %p53 = scmp.ge.s32.totalorder %s52, 2
      %s54 = scalar_select %p53, 0, %s52
      %s55 = ssub.s32 %s42, %s54
      %p56 = scmp.eq.s32.totalorder %s55, 0
      %s58 = sadd.s32 %s57, 1
      %s59 = scalar_select %p56, %s57, %s58
      %p62 = pneg %p56
      %p63 = scmp.eq.s32.totalorder %s35, 1
      %p64 = por %p62, %p63
      %p65 = scmp.ne.s32.totalorder %s57, %s60
      %p66 = scmp.eq.s32.totalorder %s35, 0
      %p67 = por %p65, %p66
      %p68 = scmp.ne.s32.totalorder %s57, %s60
      %p69 = scmp.eq.s32.totalorder %s40, 1
      %p70 = por %p68, %p69
      %p71 = scmp.ne.s32.totalorder %s60, %s61
      %p72 = scmp.eq.s32.totalorder %s40, 0
      %p73 = por %p71, %p72
      %p74 = scmp.ne.s32.totalorder %s60, %s61
      %p75 = scmp.eq.s32.totalorder %s41, 1
      %p76 = por %p74, %p75
      %p78 = scmp.ne.s32.totalorder %s61, %s77
      %p79 = scmp.eq.s32.totalorder %s41, 0
      %p80 = por %p78, %p79
      %s81 = ssub.s32 %s42, %s54
      %s82 = ssub.s32 %s43, %s50
      %s83 = sor.u32 %s81, %s82
      %p84 = scmp.eq.s32.totalorder %s83, 0
      %s86 = sadd.s32 %s85, 1
      %s87 = scalar_select %p84, %s85, %s86
      %p90 = pneg %p84
      %p91 = scmp.eq.s32.totalorder %s35, 1
      %p92 = por %p90, %p91
      %p93 = scmp.ne.s32.totalorder %s85, %s88
      %p94 = scmp.eq.s32.totalorder %s35, 0
      %p95 = por %p93, %p94
      %p96 = scmp.ne.s32.totalorder %s85, %s88
      %p97 = scmp.eq.s32.totalorder %s40, 1
      %p98 = por %p96, %p97
      %p99 = scmp.ne.s32.totalorder %s88, %s89
      %p100 = scmp.eq.s32.totalorder %s40, 0
      %p101 = por %p99, %p100
      %p102 = scmp.ne.s32.totalorder %s88, %s89
      %p103 = scmp.eq.s32.totalorder %s41, 1
      %p104 = por %p102, %p103
      %p106 = scmp.ne.s32.totalorder %s89, %s105
      %p107 = scmp.eq.s32.totalorder %s41, 0
      %p108 = por %p106, %p107
      %s109 = ssub.s32 %s42, %s54
      %s110 = ssub.s32 %s43, %s50
      %s111 = sor.u32 %s109, %s110
      %p112 = scmp.eq.s32.totalorder %s111, 0
      %s114 = sadd.s32 %s113, 1
      %s115 = scalar_select %p112, %s113, %s114
      %p118 = pneg %p112
      %p119 = scmp.eq.s32.totalorder %s35, 1
      %p120 = por %p118, %p119
      %p121 = scmp.ne.s32.totalorder %s113, %s116
      %p122 = scmp.eq.s32.totalorder %s35, 0
      %p123 = por %p121, %p122
      %p124 = scmp.ne.s32.totalorder %s113, %s116
      %p125 = scmp.eq.s32.totalorder %s40, 1
      %p126 = por %p124, %p125
      %p127 = scmp.ne.s32.totalorder %s116, %s117
      %p128 = scmp.eq.s32.totalorder %s40, 0
      %p129 = por %p127, %p128
      %p130 = scmp.ne.s32.totalorder %s116, %s117
      %p131 = scmp.eq.s32.totalorder %s41, 1
      %p132 = por %p130, %p131
      %p134 = scmp.ne.s32.totalorder %s117, %s133
      %p135 = scmp.eq.s32.totalorder %s41, 0
      %p136 = por %p134, %p135
      %s137 = ssub.s32 %s42, %s54
      %s138 = ssub.s32 %s43, %s50
      %s139 = sor.u32 %s137, %s138
      %p140 = scmp.eq.s32.totalorder %s139, 0
      %s142 = sadd.s32 %s141, 1
      %s143 = scalar_select %p140, %s141, %s142
      %p146 = pneg %p140
      %p147 = scmp.eq.s32.totalorder %s35, 1
      %p148 = por %p146, %p147
      %p149 = scmp.ne.s32.totalorder %s141, %s144
      %p150 = scmp.eq.s32.totalorder %s35, 0
      %p151 = por %p149, %p150
      %p152 = scmp.ne.s32.totalorder %s141, %s144
      %p153 = scmp.eq.s32.totalorder %s40, 1
      %p154 = por %p152, %p153
      %p155 = scmp.ne.s32.totalorder %s144, %s145
      %p156 = scmp.eq.s32.totalorder %s40, 0
      %p157 = por %p155, %p156
      %p158 = scmp.ne.s32.totalorder %s144, %s145
      %p159 = scmp.eq.s32.totalorder %s41, 1
      %p160 = por %p158, %p159
      %p162 = scmp.ne.s32.totalorder %s145, %s161
      %p163 = scmp.eq.s32.totalorder %s41, 0
      %p164 = por %p162, %p163
      %s165 = ssub.s32 %s42, %s54
      %p166 = scmp.eq.s32.totalorder %s165, 0
      %s168 = sadd.s32 %s167, 1
      %s169 = scalar_select %p166, %s167, %s168
      %p172 = pneg %p166
      %p173 = scmp.eq.s32.totalorder %s35, 1
      %p174 = por %p172, %p173
      %p175 = scmp.ne.s32.totalorder %s167, %s170
      %p176 = scmp.eq.s32.totalorder %s35, 0
      %p177 = por %p175, %p176
      %p178 = scmp.ne.s32.totalorder %s167, %s170
      %p179 = scmp.eq.s32.totalorder %s40, 1
      %p180 = por %p178, %p179
      %p181 = scmp.ne.s32.totalorder %s170, %s171
      %p182 = scmp.eq.s32.totalorder %s40, 0
      %p183 = por %p181, %p182
      %p184 = scmp.ne.s32.totalorder %s170, %s171
      %p185 = scmp.eq.s32.totalorder %s41, 1
      %p186 = por %p184, %p185
      %p188 = scmp.ne.s32.totalorder %s171, %s187
      %p189 = scmp.eq.s32.totalorder %s41, 0
      %p190 = por %p188, %p189
      %s192 = sadd.s32 %s191, 1
      %p195 = scmp.eq.s32.totalorder %s35, 1
      %p196 = scmp.ne.s32.totalorder %s191, %s193
      %p197 = scmp.eq.s32.totalorder %s35, 0
      %p198 = por %p196, %p197
      %p199 = scmp.ne.s32.totalorder %s191, %s193
      %p200 = scmp.eq.s32.totalorder %s40, 1
      %p201 = por %p199, %p200
      %p202 = scmp.ne.s32.totalorder %s193, %s194
      %p203 = scmp.eq.s32.totalorder %s40, 0
      %p204 = por %p202, %p203
      %p205 = scmp.ne.s32.totalorder %s193, %s194
      %p206 = scmp.eq.s32.totalorder %s41, 1
      %p207 = por %p205, %p206
      %p209 = scmp.ne.s32.totalorder %s194, %s208
      %p210 = scmp.eq.s32.totalorder %s41, 0
      %p211 = por %p209, %p210
      %s213 = sadd.s32 %s212, 1
      %p216 = scmp.eq.s32.totalorder %s35, 1
      %p217 = scmp.ne.s32.totalorder %s212, %s214
      %p218 = scmp.eq.s32.totalorder %s35, 0
      %p219 = por %p217, %p218
      %p220 = scmp.ne.s32.totalorder %s212, %s214
      %p221 = scmp.eq.s32.totalorder %s40, 1
      %p222 = por %p220, %p221
      %p223 = scmp.ne.s32.totalorder %s214, %s215
      %p224 = scmp.eq.s32.totalorder %s40, 0
      %p225 = por %p223, %p224
      %p226 = scmp.ne.s32.totalorder %s214, %s215
      %p227 = scmp.eq.s32.totalorder %s41, 1
      %p228 = por %p226, %p227
      %p230 = scmp.ne.s32.totalorder %s215, %s229
      %p231 = scmp.eq.s32.totalorder %s41, 0
      %p232 = por %p230, %p231
      %s234 = sadd.s32 %s233, 1
      %p237 = scmp.eq.s32.totalorder %s35, 1
      %p238 = scmp.ne.s32.totalorder %s233, %s235
      %p239 = scmp.eq.s32.totalorder %s35, 0
      %p240 = por %p238, %p239
      %p241 = scmp.ne.s32.totalorder %s233, %s235
      %p242 = scmp.eq.s32.totalorder %s40, 1
      %p243 = por %p241, %p242
      %p244 = scmp.ne.s32.totalorder %s235, %s236
      %p245 = scmp.eq.s32.totalorder %s40, 0
      %p246 = por %p244, %p245
      %p247 = scmp.ne.s32.totalorder %s235, %s236
      %p248 = scmp.eq.s32.totalorder %s41, 1
      %p249 = por %p247, %p248
      %p251 = scmp.ne.s32.totalorder %s236, %s250
      %p252 = scmp.eq.s32.totalorder %s41, 0
      %p253 = por %p251, %p252
      %s255 = sadd.s32 %s254, 1
      %p258 = scmp.eq.s32.totalorder %s35, 1
      %p259 = scmp.ne.s32.totalorder %s254, %s256
      %p260 = scmp.eq.s32.totalorder %s35, 0
      %p261 = por %p259, %p260
      %p262 = scmp.ne.s32.totalorder %s254, %s256
      %p263 = scmp.eq.s32.totalorder %s40, 1
      %p264 = por %p262, %p263
      %p265 = scmp.ne.s32.totalorder %s256, %s257
      %p266 = scmp.eq.s32.totalorder %s40, 0
      %p267 = por %p265, %p266
      %p268 = scmp.ne.s32.totalorder %s256, %s257
      %p269 = scmp.eq.s32.totalorder %s41, 1
      %p270 = por %p268, %p269
      %p272 = scmp.ne.s32.totalorder %s257, %s271
      %p273 = scmp.eq.s32.totalorder %s41, 0
      %p274 = por %p272, %p273
      %s276 = sadd.s32 %s275, 1
      %p279 = scmp.eq.s32.totalorder %s35, 1
      %p280 = scmp.ne.s32.totalorder %s275, %s277
      %p281 = scmp.eq.s32.totalorder %s35, 0
      %p282 = por %p280, %p281
      %p283 = scmp.ne.s32.totalorder %s275, %s277
      %p284 = scmp.eq.s32.totalorder %s40, 1
      %p285 = por %p283, %p284
      %p286 = scmp.ne.s32.totalorder %s277, %s278
      %p287 = scmp.eq.s32.totalorder %s40, 0
      %p288 = por %p286, %p287
      %p289 = scmp.ne.s32.totalorder %s277, %s278
      %p290 = scmp.eq.s32.totalorder %s41, 1
      %p291 = por %p289, %p290
      %p293 = scmp.ne.s32.totalorder %s278, %s292
      %p294 = scmp.eq.s32.totalorder %s41, 0
      %p295 = por %p293, %p294
      %s297 = sadd.s32 %s296, 1
      %p300 = scmp.eq.s32.totalorder %s35, 1
      %p301 = scmp.ne.s32.totalorder %s296, %s298
      %p302 = scmp.eq.s32.totalorder %s35, 0
      %p303 = por %p301, %p302
      %p304 = scmp.ne.s32.totalorder %s296, %s298
      %p305 = scmp.eq.s32.totalorder %s40, 1
      %p306 = por %p304, %p305
      %p307 = scmp.ne.s32.totalorder %s298, %s299
      %p308 = scmp.eq.s32.totalorder %s40, 0
      %p309 = por %p307, %p308
      %p310 = scmp.ne.s32.totalorder %s298, %s299
      %p311 = scmp.eq.s32.totalorder %s41, 1
      %p312 = por %p310, %p311
      %p314 = scmp.ne.s32.totalorder %s299, %s313
      %p315 = scmp.eq.s32.totalorder %s41, 0
      %p316 = por %p314, %p315
      %s318 = sadd.s32 %s317, 1
      %p321 = scmp.eq.s32.totalorder %s35, 1
      %p322 = scmp.ne.s32.totalorder %s317, %s319
      %p323 = scmp.eq.s32.totalorder %s35, 0
      %p324 = por %p322, %p323
      %p325 = scmp.ne.s32.totalorder %s317, %s319
      %p326 = scmp.eq.s32.totalorder %s40, 1
      %p327 = por %p325, %p326
      %p328 = scmp.ne.s32.totalorder %s319, %s320
      %p329 = scmp.eq.s32.totalorder %s40, 0
      %p330 = por %p328, %p329
      %p331 = scmp.ne.s32.totalorder %s319, %s320
      %p332 = scmp.eq.s32.totalorder %s41, 1
      %p333 = por %p331, %p332
      %p335 = scmp.ne.s32.totalorder %s320, %s334
      %p336 = scmp.eq.s32.totalorder %s41, 0
      %p337 = por %p335, %p336
      %s339 = sadd.s32 %s338, 1
      %p342 = scmp.eq.s32.totalorder %s35, 1
      %p343 = scmp.ne.s32.totalorder %s338, %s340
      %p344 = scmp.eq.s32.totalorder %s35, 0
      %p345 = por %p343, %p344
      %p346 = scmp.ne.s32.totalorder %s338, %s340
      %p347 = scmp.eq.s32.totalorder %s40, 1
      %p348 = por %p346, %p347
      %p349 = scmp.ne.s32.totalorder %s340, %s341
      %p350 = scmp.eq.s32.totalorder %s40, 0
      %p351 = por %p349, %p350
      %p352 = scmp.ne.s32.totalorder %s340, %s341
      %p353 = scmp.eq.s32.totalorder %s41, 1
      %p354 = por %p352, %p353
      %p356 = scmp.ne.s32.totalorder %s341, %s355
      %p357 = scmp.eq.s32.totalorder %s41, 0
      %p358 = por %p356, %p357
      %s360 = sadd.s32 %s359, 1
      %p363 = scmp.eq.s32.totalorder %s35, 1
      %p364 = scmp.ne.s32.totalorder %s359, %s361
      %p365 = scmp.eq.s32.totalorder %s35, 0
      %p366 = por %p364, %p365
      %p367 = scmp.ne.s32.totalorder %s359, %s361
      %p368 = scmp.eq.s32.totalorder %s40, 1
      %p369 = por %p367, %p368
      %p370 = scmp.ne.s32.totalorder %s361, %s362
      %p371 = scmp.eq.s32.totalorder %s40, 0
      %p372 = por %p370, %p371
      %p373 = scmp.ne.s32.totalorder %s361, %s362
      %p374 = scmp.eq.s32.totalorder %s41, 1
      %p375 = por %p373, %p374
      %p377 = scmp.ne.s32.totalorder %s362, %s376
      %p378 = scmp.eq.s32.totalorder %s41, 0
      %p379 = por %p377, %p378
      %s381 = sadd.s32 %s380, 1
      %p384 = scmp.eq.s32.totalorder %s35, 1
      %p385 = scmp.ne.s32.totalorder %s380, %s382
      %p386 = scmp.eq.s32.totalorder %s35, 0
      %p387 = por %p385, %p386
      %p388 = scmp.ne.s32.totalorder %s380, %s382
      %p389 = scmp.eq.s32.totalorder %s40, 1
      %p390 = por %p388, %p389
      %p391 = scmp.ne.s32.totalorder %s382, %s383
      %p392 = scmp.eq.s32.totalorder %s40, 0
      %p393 = por %p391, %p392
      %p394 = scmp.ne.s32.totalorder %s382, %s383
      %p395 = scmp.eq.s32.totalorder %s41, 1
      %p396 = por %p394, %p395
      %p398 = scmp.ne.s32.totalorder %s383, %s397
      %p399 = scmp.eq.s32.totalorder %s41, 0
      %p400 = por %p398, %p399
      %s402 = sadd.s32 %s401, 1
      %p405 = scmp.eq.s32.totalorder %s35, 1
      %p406 = scmp.ne.s32.totalorder %s401, %s403
      %p407 = scmp.eq.s32.totalorder %s35, 0
      %p408 = por %p406, %p407
      %p409 = scmp.ne.s32.totalorder %s401, %s403
      %p410 = scmp.eq.s32.totalorder %s40, 1
      %p411 = por %p409, %p410
      %p412 = scmp.ne.s32.totalorder %s403, %s404
      %p413 = scmp.eq.s32.totalorder %s40, 0
      %p414 = por %p412, %p413
      %p415 = scmp.ne.s32.totalorder %s403, %s404
      %p416 = scmp.eq.s32.totalorder %s41, 1
      %p417 = por %p415, %p416
      %p419 = scmp.ne.s32.totalorder %s404, %s418
      %p420 = scmp.eq.s32.totalorder %s41, 0
      %p421 = por %p419, %p420
      %s422 = ssub.s32 %s42, %s54
      %s423 = ssub.s32 %s43, %s50
      %s424 = sor.u32 %s422, %s423
      %p425 = scmp.eq.s32.totalorder %s424, 0
      %s427 = sadd.s32 %s426, 1
      %s428 = scalar_select %p425, %s426, %s427
      %p431 = pneg %p425
      %p432 = scmp.eq.s32.totalorder %s35, 1
      %p433 = por %p431, %p432
      %p434 = scmp.ne.s32.totalorder %s426, %s429
      %p435 = scmp.eq.s32.totalorder %s35, 0
      %p436 = por %p434, %p435
      %p437 = scmp.ne.s32.totalorder %s426, %s429
      %p438 = scmp.eq.s32.totalorder %s40, 1
      %p439 = por %p437, %p438
      %p440 = scmp.ne.s32.totalorder %s429, %s430
      %p441 = scmp.eq.s32.totalorder %s40, 0
      %p442 = por %p440, %p441
      %p443 = scmp.ne.s32.totalorder %s429, %s430
      %p444 = scmp.eq.s32.totalorder %s41, 1
      %p445 = por %p443, %p444
      %p447 = scmp.ne.s32.totalorder %s430, %s446
      %p448 = scmp.eq.s32.totalorder %s41, 0
      %p449 = por %p447, %p448
      %p450 = scmp.le.s32.totalorder 1, %s35
      %p451 = scmp.lt.s32.totalorder %s35, 3
      %p452 = pnand %p450, %p451
      %p453 = pneg %p452
      // Predicated region
      $region9: #{tpu_custom_call.1} parent=5 // pred_check
        _
      $region10: #{tpu_custom_call.1} parent=5 // pred_check_branch
        %455 = sbr.rel (%p452) target = $region12
      $region11: #{tpu_custom_call.1} parent=5 // pred_region
        %s456 = ssub.s32 %s35, 1
        // Predicated region
        $region13: #{tpu_custom_call.1} parent=11 // pred_check
          %p457 = pneg %p204
        $region14: #{tpu_custom_call.1} parent=11 // pred_check_branch
          %459 = sbr.rel (%p457) target = $region16
        $region15: #{tpu_custom_call.1} parent=11 // pred_region
          %s461 = ssub.s32 512, 512
          %462 = vsyncadd [#allocation9], %s461
          %s463 = sshll.u32 [#allocation8], 4
          %s464 = int_to_ptr.vmem [resolvable:$true] %s463
          %469 = dma.hbm_to_vmem [thread:$0]  %s5, 512, %s464, [#allocation9], 128, 128, 8
        $region16: #{tpu_custom_call.1} parent=11 // pred_fallthru
          _
        // Predicated region
        $region17: #{tpu_custom_call.1} parent=11 // pred_check
          %p470 = pneg %p225
        $region18: #{tpu_custom_call.1} parent=11 // pred_check_branch
          %472 = sbr.rel (%p470) target = $region20
        $region19: #{tpu_custom_call.1} parent=11 // pred_region
          %s474 = ssub.s32 512, 512
          %475 = vsyncadd [#allocation9], %s474
          %s476 = sshll.u32 [#allocation10], 4
          %s477 = int_to_ptr.vmem [resolvable:$true] %s476
          %482 = dma.hbm_to_vmem [thread:$0]  %s6, 512, %s477, [#allocation9], 128, 128, 8
        $region20: #{tpu_custom_call.1} parent=11 // pred_fallthru
          _
        // Predicated region
        $region21: #{tpu_custom_call.1} parent=11 // pred_check
          %p483 = pneg %p246
        $region22: #{tpu_custom_call.1} parent=11 // pred_check_branch
          %485 = sbr.rel (%p483) target = $region24
        $region23: #{tpu_custom_call.1} parent=11 // pred_region
          %s487 = ssub.s32 128, 128
          %488 = vsyncadd [#allocation12], %s487
          %s490 = sshll.u32 [#allocation11], 4
          %s491 = int_to_ptr.vmem [resolvable:$true] %s490
          %493 = dma.hbm_to_vmem [thread:$0]  %s7, 128, %s491, [#allocation12]
        $region24: #{tpu_custom_call.1} parent=11 // pred_fallthru
          _
        // Predicated region
        $region25: #{tpu_custom_call.1} parent=11 // pred_check
          %p494 = pneg %p267
        $region26: #{tpu_custom_call.1} parent=11 // pred_check_branch
          %496 = sbr.rel (%p494) target = $region28
        $region27: #{tpu_custom_call.1} parent=11 // pred_region
          %s498 = ssub.s32 16, 16
          %499 = vsyncadd [#allocation12], %s498
          %s501 = sshll.u32 [#allocation13], 4
          %s502 = int_to_ptr.vmem [resolvable:$true] %s501
          %504 = dma.hbm_to_vmem [thread:$0]  %s8, 16, %s502, [#allocation12]
        $region28: #{tpu_custom_call.1} parent=11 // pred_fallthru
          _
        // Predicated region
        $region29: #{tpu_custom_call.1} parent=11 // pred_check
          %p505 = pneg %p288
        $region30: #{tpu_custom_call.1} parent=11 // pred_check_branch
          %507 = sbr.rel (%p505) target = $region32
        $region31: #{tpu_custom_call.1} parent=11 // pred_region
          _
        $region32: #{tpu_custom_call.1} parent=11 // pred_fallthru
          _
        // Predicated region
        $region33: #{tpu_custom_call.1} parent=11 // pred_check
          %p508 = pneg %p309
        $region34: #{tpu_custom_call.1} parent=11 // pred_check_branch
          %510 = sbr.rel (%p508) target = $region36
        $region35: #{tpu_custom_call.1} parent=11 // pred_region
          _
        $region36: #{tpu_custom_call.1} parent=11 // pred_fallthru
          _
        // Predicated region
        $region37: #{tpu_custom_call.1} parent=11 // pred_check
          %p511 = pneg %p330
        $region38: #{tpu_custom_call.1} parent=11 // pred_check_branch
          %513 = sbr.rel (%p511) target = $region40
        $region39: #{tpu_custom_call.1} parent=11 // pred_region
          %s515 = ssub.s32 512, 512
          %516 = vsyncadd [#allocation15], %s515
          %s517 = sshll.u32 [#allocation14], 4
          %s518 = int_to_ptr.vmem [resolvable:$true] %s517
          %523 = dma.hbm_to_vmem [thread:$0]  %s11, 512, %s518, [#allocation15], 128, 128, 8
        $region40: #{tpu_custom_call.1} parent=11 // pred_fallthru
          _
        // Predicated region
        $region41: #{tpu_custom_call.1} parent=11 // pred_check
          %p524 = pneg %p351
        $region42: #{tpu_custom_call.1} parent=11 // pred_check_branch
          %526 = sbr.rel (%p524) target = $region44
        $region43: #{tpu_custom_call.1} parent=11 // pred_region
          %s528 = ssub.s32 512, 512
          %529 = vsyncadd [#allocation15], %s528
          %s530 = sshll.u32 [#allocation16], 4
          %s531 = int_to_ptr.vmem [resolvable:$true] %s530
          %536 = dma.hbm_to_vmem [thread:$0]  %s12, 512, %s531, [#allocation15], 128, 128, 8
        $region44: #{tpu_custom_call.1} parent=11 // pred_fallthru
          _
        // Predicated region
        $region45: #{tpu_custom_call.1} parent=11 // pred_check
          %p537 = pneg %p372
        $region46: #{tpu_custom_call.1} parent=11 // pred_check_branch
          %539 = sbr.rel (%p537) target = $region48
        $region47: #{tpu_custom_call.1} parent=11 // pred_region
          _
        $region48: #{tpu_custom_call.1} parent=11 // pred_fallthru
          _
        // Predicated region
        $region49: #{tpu_custom_call.1} parent=11 // pred_check
          %p540 = pneg %p393
        $region50: #{tpu_custom_call.1} parent=11 // pred_check_branch
          %542 = sbr.rel (%p540) target = $region52
        $region51: #{tpu_custom_call.1} parent=11 // pred_region
          %s544 = ssub.s32 512, 512
          %545 = vsyncadd [#allocation18], %s544
          %s546 = sshll.u32 [#allocation17], 4
          %s547 = int_to_ptr.vmem [resolvable:$true] %s546
          %552 = dma.hbm_to_vmem [thread:$0]  %s14, 512, %s547, [#allocation18], 128, 128, 8
        $region52: #{tpu_custom_call.1} parent=11 // pred_fallthru
          _
        // Predicated region
        $region53: #{tpu_custom_call.1} parent=11 // pred_check
          %p553 = pneg %p414
        $region54: #{tpu_custom_call.1} parent=11 // pred_check_branch
          %555 = sbr.rel (%p553) target = $region56
        $region55: #{tpu_custom_call.1} parent=11 // pred_region
          _
        $region56: #{tpu_custom_call.1} parent=11 // pred_fallthru
          _
      $region12: #{tpu_custom_call.1} parent=5 // pred_fallthru
        _
      %p556 = scmp.lt.s32.totalorder %s35, 2
      // Predicated region
      $region57: #{tpu_custom_call.1} parent=5 // pred_check
        %p557 = pneg %p556
      $region58: #{tpu_custom_call.1} parent=5 // pred_check_branch
        %559 = sbr.rel (%p557) target = $region60
      $region59: #{tpu_custom_call.1} parent=5 // pred_region
        // Predicated region
        $region61: #{tpu_custom_call.1} parent=59 // pred_check
          %p560 = pneg %p67
        $region62: #{tpu_custom_call.1} parent=59 // pred_check_branch
          %562 = sbr.rel (%p560) target = $region64
        $region63: #{tpu_custom_call.1} parent=59 // pred_region
          %s563 = sand.u32 %s57, 1
          %s564 = scalar_lea.sflag [#allocation3], %s563
          %s565 = sand.u32 %s57, 1
          %s566 = smul.addr %s565, 8
          %s567 = scalar_lea.vmem [#allocation2], %s566
          %s569 = ssub.s32 128, 128
          %570 = vsyncadd %s564, %s569
          %s571 = smul.addr %s42, 128
          %s572 = scalar_lea.hbm %s0, %s571
          %s574 = sshll.u32 %s567, 4
          %s575 = int_to_ptr.vmem [resolvable:$true] %s574
          %577 = dma.hbm_to_vmem [thread:$0]  %s572, 128, %s575, %s564
        $region64: #{tpu_custom_call.1} parent=59 // pred_fallthru
          _
        // Predicated region
        $region65: #{tpu_custom_call.1} parent=59 // pred_check
          %p578 = pneg %p95
        $region66: #{tpu_custom_call.1} parent=59 // pred_check_branch
          %580 = sbr.rel (%p578) target = $region68
        $region67: #{tpu_custom_call.1} parent=59 // pred_region
          %s581 = sand.u32 %s35, 1
          %s582 = scalar_lea.sflag [#allocation6], %s581
          %s583 = sand.u32 %s85, 1
          %s584 = smul.addr %s583, 8
          %s585 = scalar_lea.vmem [#allocation5], %s584
          %s587 = ssub.s32 128, 128
          %588 = vsyncadd %s582, %s587
          %s589 = sadd.s32 %s43, %s42
          %s590 = smul.addr %s589, 128
          %s591 = scalar_lea.hbm %s1, %s590
          %s593 = sshll.u32 %s585, 4
          %s594 = int_to_ptr.vmem [resolvable:$true] %s593
          %596 = dma.hbm_to_vmem [thread:$0]  %s591, 128, %s594, %s582
        $region68: #{tpu_custom_call.1} parent=59 // pred_fallthru
          _
        // Predicated region
        $region69: #{tpu_custom_call.1} parent=59 // pred_check
          %p597 = pneg %p123
        $region70: #{tpu_custom_call.1} parent=59 // pred_check_branch
          %599 = sbr.rel (%p597) target = $region72
        $region71: #{tpu_custom_call.1} parent=59 // pred_region
          %s600 = sand.u32 %s35, 1
          %s601 = scalar_lea.sflag [#allocation6], %s600
          %s602 = sand.u32 %s113, 1
          %s603 = smul.addr %s602, 64
          %s604 = scalar_lea.vmem [#allocation7], %s603
          %s605 = smul.u32 8, %s43
          %s607 = ssub.s32 1024, 1024
          %608 = vsyncadd %s601, %s607
          %s609 = smul.addr %s42, 8
          %s610 = sadd.s32 %s605, %s609
          %s611 = smul.addr %s610, 128
          %s612 = scalar_lea.hbm %s2, %s611
          %s613 = sshll.u32 %s604, 4
          %s614 = int_to_ptr.vmem [resolvable:$true] %s613
          %619 = dma.hbm_to_vmem [thread:$0]  %s612, 1024, %s614, %s601, 128, 128, 8
        $region72: #{tpu_custom_call.1} parent=59 // pred_fallthru
          _
        // Predicated region
        $region73: #{tpu_custom_call.1} parent=59 // pred_check
          %p620 = pneg %p151
        $region74: #{tpu_custom_call.1} parent=59 // pred_check_branch
          %622 = sbr.rel (%p620) target = $region76
        $region75: #{tpu_custom_call.1} parent=59 // pred_region
          %p623 = scmp.lt.s32.totalorder %s42, 1
          %s624 = scalar_select %p623, %s42, 1
          %p625 = scmp.lt.s32.totalorder %s43, 0
          %s626 = scalar_select %p625, %s43, 0
          %s627 = sadd.s32 %s626, %s624
          %s628 = smul.addr %s627, 8
          %s629 = scalar_lea.vmem %s3, %s628
        $region76: #{tpu_custom_call.1} parent=59 // pred_fallthru
          _
        // Predicated region
        $region77: #{tpu_custom_call.1} parent=59 // pred_check
          %p630 = pneg %p177
        $region78: #{tpu_custom_call.1} parent=59 // pred_check_branch
          %632 = sbr.rel (%p630) target = $region80
        $region79: #{tpu_custom_call.1} parent=59 // pred_region
          %p633 = scmp.lt.s32.totalorder %s42, 1
          %s634 = scalar_select %p633, %s42, 1
          %s635 = scalar_lea.vmem %s4, %s634
        $region80: #{tpu_custom_call.1} parent=59 // pred_fallthru
          _
      $region60: #{tpu_custom_call.1} parent=5 // pred_fallthru
        _
      %p636 = scmp.le.s32.totalorder 1, %s35
      %p637 = scmp.lt.s32.totalorder %s35, 3
      %p638 = pnand %p636, %p637
      %p639 = pneg %p638
      // Predicated region
      $region81: #{tpu_custom_call.1} parent=5 // pred_check
        _
      $region82: #{tpu_custom_call.1} parent=5 // pred_check_branch
        %641 = sbr.rel (%p638) target = $region84
      $region83: #{tpu_custom_call.1} parent=5 // pred_region
        %s642 = ssub.s32 %s35, 1
        %s643 = sand.u32 %s60, 1
        %s644 = scalar_lea.sflag [#allocation3], %s643
        %s645 = sand.u32 %s60, 1
        %s646 = smul.addr %s645, 8
        %s647 = scalar_lea.vmem [#allocation2], %s646
        // Predicated region
        $region85: #{tpu_custom_call.1} parent=83 // pred_check
          %p648 = pneg %p73
        $region86: #{tpu_custom_call.1} parent=83 // pred_check_branch
          %650 = sbr.rel (%p648) target = $region88
        $region87: #{tpu_custom_call.1} parent=83 // pred_region
          %651 = dma.done %s644, 128
        $region88: #{tpu_custom_call.1} parent=83 // pred_fallthru
          _
        %s652 = sand.u32 %s40, 1
        %s653 = scalar_lea.sflag [#allocation6], %s652
        %s654 = sand.u32 %s88, 1
        %s655 = smul.addr %s654, 8
        %s656 = scalar_lea.vmem [#allocation5], %s655
        // Predicated region
        $region89: #{tpu_custom_call.1} parent=83 // pred_check
          %p657 = pneg %p101
        $region90: #{tpu_custom_call.1} parent=83 // pred_check_branch
          %659 = sbr.rel (%p657) target = $region92
        $region91: #{tpu_custom_call.1} parent=83 // pred_region
          %660 = dma.done %s653, 128
        $region92: #{tpu_custom_call.1} parent=83 // pred_fallthru
          _
        %s661 = sand.u32 %s40, 1
        %s662 = scalar_lea.sflag [#allocation6], %s661
        %s663 = sand.u32 %s116, 1
        %s664 = smul.addr %s663, 64
        %s665 = scalar_lea.vmem [#allocation7], %s664
        // Predicated region
        $region93: #{tpu_custom_call.1} parent=83 // pred_check
          %p666 = pneg %p129
        $region94: #{tpu_custom_call.1} parent=83 // pred_check_branch
          %668 = sbr.rel (%p666) target = $region96
        $region95: #{tpu_custom_call.1} parent=83 // pred_region
          %669 = dma.done %s662, 1024
        $region96: #{tpu_custom_call.1} parent=83 // pred_fallthru
          _
        // Predicated region
        $region97: #{tpu_custom_call.1} parent=83 // pred_check
          %p670 = pneg %p204
        $region98: #{tpu_custom_call.1} parent=83 // pred_check_branch
          %672 = sbr.rel (%p670) target = $region100
        $region99: #{tpu_custom_call.1} parent=83 // pred_region
          %673 = dma.done [#allocation9], 512
        $region100: #{tpu_custom_call.1} parent=83 // pred_fallthru
          _
        // Predicated region
        $region101: #{tpu_custom_call.1} parent=83 // pred_check
          %p674 = pneg %p225
        $region102: #{tpu_custom_call.1} parent=83 // pred_check_branch
          %676 = sbr.rel (%p674) target = $region104
        $region103: #{tpu_custom_call.1} parent=83 // pred_region
          %677 = dma.done [#allocation9], 512
        $region104: #{tpu_custom_call.1} parent=83 // pred_fallthru
          _
        // Predicated region
        $region105: #{tpu_custom_call.1} parent=83 // pred_check
          %p678 = pneg %p246
        $region106: #{tpu_custom_call.1} parent=83 // pred_check_branch
          %680 = sbr.rel (%p678) target = $region108
        $region107: #{tpu_custom_call.1} parent=83 // pred_region
          %681 = dma.done [#allocation12], 128
        $region108: #{tpu_custom_call.1} parent=83 // pred_fallthru
          _
        // Predicated region
        $region109: #{tpu_custom_call.1} parent=83 // pred_check
          %p682 = pneg %p267
        $region110: #{tpu_custom_call.1} parent=83 // pred_check_branch
          %684 = sbr.rel (%p682) target = $region112
        $region111: #{tpu_custom_call.1} parent=83 // pred_region
          %685 = dma.done [#allocation12], 16
        $region112: #{tpu_custom_call.1} parent=83 // pred_fallthru
          _
        // Predicated region
        $region113: #{tpu_custom_call.1} parent=83 // pred_check
          %p686 = pneg %p330
        $region114: #{tpu_custom_call.1} parent=83 // pred_check_branch
          %688 = sbr.rel (%p686) target = $region116
        $region115: #{tpu_custom_call.1} parent=83 // pred_region
          %689 = dma.done [#allocation15], 512
        $region116: #{tpu_custom_call.1} parent=83 // pred_fallthru
          _
        // Predicated region
        $region117: #{tpu_custom_call.1} parent=83 // pred_check
          %p690 = pneg %p351
        $region118: #{tpu_custom_call.1} parent=83 // pred_check_branch
          %692 = sbr.rel (%p690) target = $region120
        $region119: #{tpu_custom_call.1} parent=83 // pred_region
          %693 = dma.done [#allocation15], 512
        $region120: #{tpu_custom_call.1} parent=83 // pred_fallthru
          _
        // Predicated region
        $region121: #{tpu_custom_call.1} parent=83 // pred_check
          %p694 = pneg %p393
        $region122: #{tpu_custom_call.1} parent=83 // pred_check_branch
          %696 = sbr.rel (%p694) target = $region124
        $region123: #{tpu_custom_call.1} parent=83 // pred_region
          %697 = dma.done [#allocation18], 512
        $region124: #{tpu_custom_call.1} parent=83 // pred_fallthru
          _
        %s698 = sand.u32 %s60, 1
        %s699 = scalar_lea.sflag [#allocation3], %s698
        %s700 = sand.u32 %s60, 1
        %s701 = smul.addr %s700, 8
        %s702 = scalar_lea.vmem [#allocation2], %s701
        %p703 = pneg %p73
        %p704 = pneg %p70
        %s705 = sand.u32 %s40, 1
        %s706 = scalar_lea.sflag [#allocation6], %s705
        %s707 = sand.u32 %s88, 1
        %s708 = smul.addr %s707, 8
        %s709 = scalar_lea.vmem [#allocation5], %s708
        %p710 = pneg %p101
        %p711 = pneg %p98
        %s712 = sand.u32 %s40, 1
        %s713 = scalar_lea.sflag [#allocation6], %s712
        %s714 = sand.u32 %s116, 1
        %s715 = smul.addr %s714, 64
        %s716 = scalar_lea.vmem [#allocation7], %s715
        %p717 = pneg %p129
        %p718 = pneg %p126
        %p719 = scmp.lt.s32.totalorder %s44, 1
        %s720 = scalar_select %p719, %s44, 1
        %p721 = scmp.lt.s32.totalorder %s45, 0
        %s722 = scalar_select %p721, %s45, 0
        %s723 = sadd.s32 %s722, %s720
        %s724 = smul.addr %s723, 8
        %s725 = scalar_lea.vmem %s3, %s724
        %p726 = pneg %p157
        %p727 = pneg %p154
        %p728 = scmp.lt.s32.totalorder %s44, 1
        %s729 = scalar_select %p728, %s44, 1
        %s730 = scalar_lea.vmem %s4, %s729
        %p731 = pneg %p183
        %p732 = pneg %p180
        %p733 = pneg %p204
        %p734 = pneg %p201
        %p735 = pneg %p225
        %p736 = pneg %p222
        %p737 = pneg %p246
        %p738 = pneg %p243
        %p739 = pneg %p267
        %p740 = pneg %p264
        %p741 = pneg %p288
        %p742 = pneg %p285
        %p743 = pneg %p309
        %p744 = pneg %p306
        %p745 = pneg %p330
        %p746 = pneg %p327
        %p747 = pneg %p351
        %p748 = pneg %p348
        %p749 = pneg %p372
        %p750 = pneg %p369
        %p751 = pneg %p393
        %p752 = pneg %p390
        %p753 = pneg %p414
        %p754 = pneg %p411
        %p755 = pneg %p442
        %p756 = pneg %p439
        %s757 = sand.u32 %s429, 1
        %s758 = scalar_lea.sflag [#allocation4], %s757
        %s759 = sand.u32 %s429, 1
        %s760 = smul.addr %s759, 8
        %s761 = scalar_lea.vmem [#allocation19], %s760
        %s762 = smul.u32 8, %s45
        %p763 = scmp.lt.s32.totalorder %s44, 1
        %s764 = scalar_select %p763, %s44, 1
        %p765 = scmp.lt.s32.totalorder %s45, 0
        %s766 = scalar_select %p765, %s45, 0
        %s767 = sadd.s32 %s766, %s764
        %s768 = smul.addr %s767, 8
        %s769 = scalar_lea.vmem %s3, %s768
        %p770 = scmp.lt.s32.totalorder %s44, 1
        %s771 = scalar_select %p770, %s44, 1
        %s772 = scalar_lea.vmem %s4, %s771
        %v773 = vld [vmem:[%s647] sm:$0xff]
        %v774 = vld [vmem:[%s656] sm:$0xff]
        %v775 = vld [vmem:[%s665] sm:$0xff]
        %v776 = vld [vmem:[%s665 + $0x8] sm:$0xff]
        %v777 = vld [vmem:[%s665 + $0x10] sm:$0xff]
        %v778 = vld [vmem:[%s665 + $0x18] sm:$0xff]
        %v779 = vld [vmem:[%s665 + $0x20] sm:$0xff]
        %v780 = vld [vmem:[%s665 + $0x28] sm:$0xff]
        %v781 = vld [vmem:[%s665 + $0x30] sm:$0xff]
        %v782 = vld [vmem:[%s665 + $0x38] sm:$0xff]
        %v783 = vld [vmem:[%s769] sm:$0xff]
        %v784 = vld [vmem:[%s772] sm:$0x1]
        %v785 = vld [vmem:[#allocation8] sm:$0xff]
        %v786 = vld [vmem:[#allocation8 + $0x8] sm:$0xff]
        %v787 = vld [vmem:[#allocation8 + $0x10] sm:$0xff]
        %v788 = vld [vmem:[#allocation8 + $0x18] sm:$0xff]
        %vm789 = vcmask 261120
        %v791 = vsel %vm789, %v773, 0
        %793 = vmatprep.subr.mxu0 0.0
        %794 = vmatpush1.msra.mxu0 0.0
        %795 = vmatprep.subr.mxu0 0.0
        %796 = vmatpush1.msra.mxu0 0.0
        %797 = vmatprep.subr.mxu0 0.0
        %798 = vmatpush1.msra.mxu0 0.0
        %799 = vmatprep.subr.mxu0 0.0
        %800 = vmatpush1.msra.mxu0 0.0
        %801 = vmatprep.subr.mxu0 0.0
        %802 = vmatpush1.msra.mxu0 0.0
        %803 = vmatprep.subr.mxu0 0.0
        %804 = vmatpush1.msra.mxu0 0.0
        %805 = vmatprep.subr.mxu0 0.0
        %806 = vmatpush1.msra.mxu0 0.0
        %807 = vmatprep.subr.mxu0 0.0
        %808 = vmatpush1.msra.mxu0 0.0
        %809 = vmatprep.subr.mxu0 0.0
        %810 = vmatpush1.msra.mxu0 0.0
        %811 = vmatprep.subr.mxu0 0.0
        %812 = vmatpush1.msra.mxu0 0.0
        %813 = vmatprep.subr.mxu0 0.0
        %814 = vmatpush1.msra.mxu0 0.0
        %815 = vmatprep.subr.mxu0 0.0
        %816 = vmatpush1.msra.mxu0 0.0
        %817 = vmatprep.subr.mxu0 0.0
        %818 = vmatpush1.msra.mxu0 %v788
        %819 = vmatprep.subr.mxu0 0.0
        %820 = vmatpush1.msra.mxu0 %v787
        %821 = vmatprep.subr.mxu0 0.0
        %822 = vmatpush1.msra.mxu0 %v786
        %823 = vmatprep.subr.mxu0 0.0
        %824 = vmatpush1.msra.mxu0 %v785
        %825 = vmatprep.subr.mxu0 0.0
        %826 = vmatpush2.msra.mxu0 0.0
        %827 = vmatprep.subr.mxu0 0.0
        %828 = vmatpush2.msra.mxu0 0.0
        %829 = vmatprep.subr.mxu0 0.0
        %830 = vmatpush2.msra.mxu0 0.0
        %831 = vmatprep.subr.mxu0 0.0
        %832 = vmatpush2.msra.mxu0 0.0
        %833 = vmatprep.subr.mxu0 0.0
        %834 = vmatpush2.msra.mxu0 0.0
        %835 = vmatprep.subr.mxu0 0.0
        %836 = vmatpush2.msra.mxu0 0.0
        %837 = vmatprep.subr.mxu0 0.0
        %838 = vmatpush2.msra.mxu0 0.0
        %839 = vmatprep.subr.mxu0 0.0
        %840 = vmatpush2.msra.mxu0 0.0
        %841 = vmatprep.subr.mxu0 0.0
        %842 = vmatpush2.msra.mxu0 0.0
        %843 = vmatprep.subr.mxu0 0.0
        %844 = vmatpush2.msra.mxu0 0.0
        %845 = vmatprep.subr.mxu0 0.0
        %846 = vmatpush2.msra.mxu0 0.0
        %847 = vmatprep.subr.mxu0 0.0
        %848 = vmatpush2.msra.mxu0 0.0
        %849 = vmatprep.subr.mxu0 0.0
        %850 = vmatpush2.msra.mxu0 0.0
        %851 = vmatprep.subr.mxu0 0.0
        %852 = vmatpush2.msra.mxu0 0.0
        %853 = vmatprep.subr.mxu0 0.0
        %854 = vmatpush2.msra.mxu0 0.0
        %855 = vmatprep.subr.mxu0 0.0
        %856 = vmatpush2.msra.mxu0 0.0
        %857 = vmatprep.mubr.f32.mxu0 0.0
        %858 = vmatmul.mubr.f32.gmra.mxu0 %v791
        %v859 = vpop.f32.mrf.mxu0
        %v860 = vadd.f32 0.0, %v859
        %v861 = vpop.f32.mrf.mxu0
        %862 = vdwg.mxu0
        %v863 = vld [vmem:[#allocation10] sm:$0xff]
        %v864 = vld [vmem:[#allocation10 + $0x8] sm:$0xff]
        %v865 = vld [vmem:[#allocation10 + $0x10] sm:$0xff]
        %v866 = vld [vmem:[#allocation10 + $0x18] sm:$0xff]
        %v868 = vsel %vm789, %v774, 0
        %870 = vmatprep.subr.mxu0 0.0
        %871 = vmatpush1.msra.mxu0 0.0
        %872 = vmatprep.subr.mxu0 0.0
        %873 = vmatpush1.msra.mxu0 0.0
        %874 = vmatprep.subr.mxu0 0.0
        %875 = vmatpush1.msra.mxu0 0.0
        %876 = vmatprep.subr.mxu0 0.0
        %877 = vmatpush1.msra.mxu0 0.0
        %878 = vmatprep.subr.mxu0 0.0
        %879 = vmatpush1.msra.mxu0 0.0
        %880 = vmatprep.subr.mxu0 0.0
        %881 = vmatpush1.msra.mxu0 0.0
        %882 = vmatprep.subr.mxu0 0.0
        %883 = vmatpush1.msra.mxu0 0.0
        %884 = vmatprep.subr.mxu0 0.0
        %885 = vmatpush1.msra.mxu0 0.0
        %886 = vmatprep.subr.mxu0 0.0
        %887 = vmatpush1.msra.mxu0 0.0
        %888 = vmatprep.subr.mxu0 0.0
        %889 = vmatpush1.msra.mxu0 0.0
        %890 = vmatprep.subr.mxu0 0.0
        %891 = vmatpush1.msra.mxu0 0.0
        %892 = vmatprep.subr.mxu0 0.0
        %893 = vmatpush1.msra.mxu0 0.0
        %894 = vmatprep.subr.mxu0 0.0
        %895 = vmatpush1.msra.mxu0 %v866
        %896 = vmatprep.subr.mxu0 0.0
        %897 = vmatpush1.msra.mxu0 %v865
        %898 = vmatprep.subr.mxu0 0.0
        %899 = vmatpush1.msra.mxu0 %v864
        %900 = vmatprep.subr.mxu0 0.0
        %901 = vmatpush1.msra.mxu0 %v863
        %902 = vmatprep.subr.mxu0 0.0
        %903 = vmatpush2.msra.mxu0 0.0
        %904 = vmatprep.subr.mxu0 0.0
        %905 = vmatpush2.msra.mxu0 0.0
        %906 = vmatprep.subr.mxu0 0.0
        %907 = vmatpush2.msra.mxu0 0.0
        %908 = vmatprep.subr.mxu0 0.0
        %909 = vmatpush2.msra.mxu0 0.0
        %910 = vmatprep.subr.mxu0 0.0
        %911 = vmatpush2.msra.mxu0 0.0
        %912 = vmatprep.subr.mxu0 0.0
        %913 = vmatpush2.msra.mxu0 0.0
        %914 = vmatprep.subr.mxu0 0.0
        %915 = vmatpush2.msra.mxu0 0.0
        %916 = vmatprep.subr.mxu0 0.0
        %917 = vmatpush2.msra.mxu0 0.0
        %918 = vmatprep.subr.mxu0 0.0
        %919 = vmatpush2.msra.mxu0 0.0
        %920 = vmatprep.subr.mxu0 0.0
        %921 = vmatpush2.msra.mxu0 0.0
        %922 = vmatprep.subr.mxu0 0.0
        %923 = vmatpush2.msra.mxu0 0.0
        %924 = vmatprep.subr.mxu0 0.0
        %925 = vmatpush2.msra.mxu0 0.0
        %926 = vmatprep.subr.mxu0 0.0
        %927 = vmatpush2.msra.mxu0 0.0
        %928 = vmatprep.subr.mxu0 0.0
        %929 = vmatpush2.msra.mxu0 0.0
        %930 = vmatprep.subr.mxu0 0.0
        %931 = vmatpush2.msra.mxu0 0.0
        %932 = vmatprep.subr.mxu0 0.0
        %933 = vmatpush2.msra.mxu0 0.0
        %934 = vmatprep.mubr.f32.mxu0 0.0
        %935 = vmatmul.mubr.f32.gmra.mxu0 %v868
        %v936 = vpop.f32.mrf.mxu0
        %v937 = vadd.f32 0.0, %v936
        %v938 = vpop.f32.mrf.mxu0
        %939 = vdwg.mxu0
        %v940 = vld [vmem:[#allocation11] sm:$0xff]
        %vm941 = vcmask 64512
        %v943 = vsel %vm941, %v775, 0
        %v946 = vsel %vm941, %v776, 0
        %v949 = vsel %vm941, %v777, 0
        %v952 = vsel %vm941, %v778, 0
        %v955 = vsel %vm941, %v779, 0
        %v958 = vsel %vm941, %v780, 0
        %v961 = vsel %vm941, %v781, 0
        %v964 = vsel %vm941, %v782, 0
        %966 = vmatprep.subr.mxu0 0.0
        %967 = vmatpush1.msra.mxu0 0.0
        %968 = vmatprep.subr.mxu0 0.0
        %969 = vmatpush1.msra.mxu0 0.0
        %970 = vmatprep.subr.mxu0 0.0
        %971 = vmatpush1.msra.mxu0 0.0
        %972 = vmatprep.subr.mxu0 0.0
        %973 = vmatpush1.msra.mxu0 0.0
        %974 = vmatprep.subr.mxu0 0.0
        %975 = vmatpush1.msra.mxu0 0.0
        %976 = vmatprep.subr.mxu0 0.0
        %977 = vmatpush1.msra.mxu0 0.0
        %978 = vmatprep.subr.mxu0 0.0
        %979 = vmatpush1.msra.mxu0 0.0
        %980 = vmatprep.subr.mxu0 0.0
        %981 = vmatpush1.msra.mxu0 0.0
        %982 = vmatprep.subr.mxu0 0.0
        %983 = vmatpush1.msra.mxu0 0.0
        %984 = vmatprep.subr.mxu0 0.0
        %985 = vmatpush1.msra.mxu0 0.0
        %986 = vmatprep.subr.mxu0 0.0
        %987 = vmatpush1.msra.mxu0 0.0
        %988 = vmatprep.subr.mxu0 0.0
        %989 = vmatpush1.msra.mxu0 0.0
        %990 = vmatprep.subr.mxu0 0.0
        %991 = vmatpush1.msra.mxu0 0.0
        %992 = vmatprep.subr.mxu0 0.0
        %993 = vmatpush1.msra.mxu0 0.0
        %994 = vmatprep.subr.mxu0 0.0
        %995 = vmatpush1.msra.mxu0 0.0
        %996 = vmatprep.subr.mxu0 0.0
        %997 = vmatpush1.msra.mxu0 %v940
        %998 = vmatprep.subr.mxu0 0.0
        %999 = vmatpush2.msra.mxu0 0.0
        %1000 = vmatprep.subr.mxu0 0.0
        %1001 = vmatpush2.msra.mxu0 0.0
        %1002 = vmatprep.subr.mxu0 0.0
        %1003 = vmatpush2.msra.mxu0 0.0
        %1004 = vmatprep.subr.mxu0 0.0
        %1005 = vmatpush2.msra.mxu0 0.0
        %1006 = vmatprep.subr.mxu0 0.0
        %1007 = vmatpush2.msra.mxu0 0.0
        %1008 = vmatprep.subr.mxu0 0.0
        %1009 = vmatpush2.msra.mxu0 0.0
        %1010 = vmatprep.subr.mxu0 0.0
        %1011 = vmatpush2.msra.mxu0 0.0
        %1012 = vmatprep.subr.mxu0 0.0
        %1013 = vmatpush2.msra.mxu0 0.0
        %1014 = vmatprep.subr.mxu0 0.0
        %1015 = vmatpush2.msra.mxu0 0.0
        %1016 = vmatprep.subr.mxu0 0.0
        %1017 = vmatpush2.msra.mxu0 0.0
        %1018 = vmatprep.subr.mxu0 0.0
        %1019 = vmatpush2.msra.mxu0 0.0
        %1020 = vmatprep.subr.mxu0 0.0
        %1021 = vmatpush2.msra.mxu0 0.0
        %1022 = vmatprep.subr.mxu0 0.0
        %1023 = vmatpush2.msra.mxu0 0.0
        %1024 = vmatprep.subr.mxu0 0.0
        %1025 = vmatpush2.msra.mxu0 0.0
        %1026 = vmatprep.subr.mxu0 0.0
        %1027 = vmatpush2.msra.mxu0 0.0
        %1028 = vmatprep.subr.mxu0 0.0
        %1029 = vmatpush2.msra.mxu0 0.0
        %1030 = vmatprep.mubr.f32.mxu0 0.0
        %1031 = vmatmul.mubr.f32.gmra.mxu0 %v943
        %v1032 = vpop.f32.mrf.mxu0
        %v1033 = vadd.f32 0.0, %v1032
        %v1034 = vpop.f32.mrf.mxu0
        %1035 = vmatprep.mubr.f32.mxu0 0.0
        %1036 = vmatmul.mubr.f32.gmra.mxu0 %v946
        %v1037 = vpop.f32.mrf.mxu0
        %v1038 = vadd.f32 0.0, %v1037
        %v1039 = vpop.f32.mrf.mxu0
        %1040 = vmatprep.mubr.f32.mxu0 0.0
        %1041 = vmatmul.mubr.f32.gmra.mxu0 %v949
        %v1042 = vpop.f32.mrf.mxu0
        %v1043 = vadd.f32 0.0, %v1042
        %v1044 = vpop.f32.mrf.mxu0
        %1045 = vmatprep.mubr.f32.mxu0 0.0
        %1046 = vmatmul.mubr.f32.gmra.mxu0 %v952
        %v1047 = vpop.f32.mrf.mxu0
        %v1048 = vadd.f32 0.0, %v1047
        %v1049 = vpop.f32.mrf.mxu0
        %1050 = vmatprep.mubr.f32.mxu0 0.0
        %1051 = vmatmul.mubr.f32.gmra.mxu0 %v955
        %v1052 = vpop.f32.mrf.mxu0
        %v1053 = vadd.f32 0.0, %v1052
        %v1054 = vpop.f32.mrf.mxu0
        %1055 = vmatprep.mubr.f32.mxu0 0.0
        %1056 = vmatmul.mubr.f32.gmra.mxu0 %v958
        %v1057 = vpop.f32.mrf.mxu0
        %v1058 = vadd.f32 0.0, %v1057
        %v1059 = vpop.f32.mrf.mxu0
        %1060 = vmatprep.mubr.f32.mxu0 0.0
        %1061 = vmatmul.mubr.f32.gmra.mxu0 %v961
        %v1062 = vpop.f32.mrf.mxu0
        %v1063 = vadd.f32 0.0, %v1062
        %v1064 = vpop.f32.mrf.mxu0
        %1065 = vmatprep.mubr.f32.mxu0 0.0
        %1066 = vmatmul.mubr.f32.gmra.mxu0 %v964
        %v1067 = vpop.f32.mrf.mxu0
        %v1068 = vadd.f32 0.0, %v1067
        %v1069 = vpop.f32.mrf.mxu0
        %1070 = vdwg.mxu0
        %v1072 = vcombine.high %v937, %v937
        %v1074 = vunpack.c.l.s4 1966171168
        %v1075 = vunpack.c.0.s8 %v1074
        %v1076 = vlaneseq
        %v1077 = vshrl.u32 %v1076, 7
        %v1078 = vsub.s32 %v1075, %v1077
        %v1079 = vrot.slane %v937, %v1078
        %v1081 = vunpack.c.l.s4 1966171168
        %v1082 = vunpack.c.0.s8 %v1081
        %v1083 = vlaneseq
        %v1084 = vshrl.u32 %v1083, 7
        %v1085 = vsub.s32 %v1082, %v1084
        %v1086 = vrot.slane %v1072, %v1085
        %v1087 = vcombine.high %v1079, %v1079
        %v1088 = vcombine.high %v1086, %v1086
        %v1090 = vunpack.c.l.s4 1966171168
        %v1091 = vunpack.c.0.s8 %v1090
        %v1092 = vlaneseq
        %v1093 = vshrl.u32 %v1092, 7
        %v1094 = vsub.s32 %v1091, %v1093
        %v1095 = vrot.slane %v1079, %v1094
        %v1097 = vunpack.c.l.s4 1966171168
        %v1098 = vunpack.c.0.s8 %v1097
        %v1099 = vlaneseq
        %v1100 = vshrl.u32 %v1099, 7
        %v1101 = vsub.s32 %v1098, %v1100
        %v1102 = vrot.slane %v1086, %v1101
        %v1104 = vunpack.c.l.s4 1966171168
        %v1105 = vunpack.c.0.s8 %v1104
        %v1106 = vlaneseq
        %v1107 = vshrl.u32 %v1106, 7
        %v1108 = vsub.s32 %v1105, %v1107
        %v1109 = vrot.slane %v1087, %v1108
        %v1111 = vunpack.c.l.s4 1966171168
        %v1112 = vunpack.c.0.s8 %v1111
        %v1113 = vlaneseq
        %v1114 = vshrl.u32 %v1113, 7
        %v1115 = vsub.s32 %v1112, %v1114
        %v1116 = vrot.slane %v1088, %v1115
        %v1117 = vcombine.high %v1095, %v1095
        %v1118 = vcombine.high %v1102, %v1102
        %v1119 = vcombine.high %v1109, %v1109
        %v1120 = vcombine.high %v1116, %v1116
        %v1121 = vlaneseq
        %v1122 = vshrl.u32 %v1121, 7
        %v1123 = vsub.s32 0, %v1122
        %v1124 = vrot.slane %v1095, %v1123
        %v1125 = vlaneseq
        %v1126 = vshrl.u32 %v1125, 7
        %v1127 = vsub.s32 0, %v1126
        %v1128 = vrot.slane %v1109, %v1127
        %v1129 = vlaneseq
        %v1130 = vshrl.u32 %v1129, 7
        %v1131 = vsub.s32 0, %v1130
        %v1132 = vrot.slane %v1117, %v1131
        %v1133 = vlaneseq
        %v1134 = vshrl.u32 %v1133, 7
        %v1135 = vsub.s32 0, %v1134
        %v1136 = vrot.slane %v1119, %v1135
        %v1137 = vlaneseq
        %v1138 = vshrl.u32 %v1137, 7
        %v1139 = vsub.s32 0, %v1138
        %v1140 = vrot.slane %v1102, %v1139
        %v1141 = vlaneseq
        %v1142 = vshrl.u32 %v1141, 7
        %v1143 = vsub.s32 0, %v1142
        %v1144 = vrot.slane %v1116, %v1143
        %v1145 = vlaneseq
        %v1146 = vshrl.u32 %v1145, 7
        %v1147 = vsub.s32 0, %v1146
        %v1148 = vrot.slane %v1118, %v1147
        %v1149 = vlaneseq
        %v1150 = vshrl.u32 %v1149, 7
        %v1151 = vsub.s32 0, %v1150
        %v1152 = vrot.slane %v1120, %v1151
        %v1161 = vadd.f32 %v860, %v1124
        %v1162 = vadd.f32 %v860, %v1128
        %v1163 = vadd.f32 %v860, %v1132
        %v1164 = vadd.f32 %v860, %v1136
        %v1165 = vadd.f32 %v860, %v1140
        %v1166 = vadd.f32 %v860, %v1144
        %v1167 = vadd.f32 %v860, %v1148
        %v1168 = vadd.f32 %v860, %v1152
        %v1169 = vadd.f32 %v1161, %v1033
        %v1170 = vadd.f32 %v1162, %v1038
        %v1171 = vadd.f32 %v1163, %v1043
        %v1172 = vadd.f32 %v1164, %v1048
        %v1173 = vadd.f32 %v1165, %v1053
        %v1174 = vadd.f32 %v1166, %v1058
        %v1175 = vadd.f32 %v1167, %v1063
        %v1176 = vadd.f32 %v1168, %v1068
        %v1177 = vld [vmem:[#allocation13] sm:$0x1]
        %v1179 = vlaneseq
        %v1180 = vshrl.u32 %v1179, 7
        %v1181 = vsub.s32 0, %v1180
        %v1182 = vrot.slane %v1177, %v1181
        %v1184 = vadd.f32 %v1169, %v1182
        %v1185 = vadd.f32 %v1170, %v1182
        %v1186 = vadd.f32 %v1171, %v1182
        %v1187 = vadd.f32 %v1172, %v1182
        %v1188 = vadd.f32 %v1173, %v1182
        %v1189 = vadd.f32 %v1174, %v1182
        %v1190 = vadd.f32 %v1175, %v1182
        %v1191 = vadd.f32 %v1176, %v1182
        %v1192 = vxor.u32 %v1184, 2147483648
        %v1193 = vxor.u32 %v1185, 2147483648
        %v1194 = vxor.u32 %v1186, 2147483648
        %v1195 = vxor.u32 %v1187, 2147483648
        %v1196 = vxor.u32 %v1188, 2147483648
        %v1197 = vxor.u32 %v1189, 2147483648
        %v1198 = vxor.u32 %v1190, 2147483648
        %v1199 = vxor.u32 %v1191, 2147483648
        %v1200 = vmul.f32 %v1192, 1.442695
        %v1201 = vpow.pop %v1200
        %v1202 = vmul.f32 %v1193, 1.442695
        %v1203 = vpow.pop %v1202
        %v1204 = vmul.f32 %v1194, 1.442695
        %v1205 = vpow.pop %v1204
        %v1206 = vmul.f32 %v1195, 1.442695
        %v1207 = vpow.pop %v1206
        %v1208 = vmul.f32 %v1196, 1.442695
        %v1209 = vpow.pop %v1208
        %v1210 = vmul.f32 %v1197, 1.442695
        %v1211 = vpow.pop %v1210
        %v1212 = vmul.f32 %v1198, 1.442695
        %v1213 = vpow.pop %v1212
        %v1214 = vmul.f32 %v1199, 1.442695
        %v1215 = vpow.pop %v1214
        %v1216 = vadd.f32 %v1201, 1.0
        %v1217 = vadd.f32 %v1203, 1.0
        %v1218 = vadd.f32 %v1205, 1.0
        %v1219 = vadd.f32 %v1207, 1.0
        %v1220 = vadd.f32 %v1209, 1.0
        %v1221 = vadd.f32 %v1211, 1.0
        %v1222 = vadd.f32 %v1213, 1.0
        %v1223 = vadd.f32 %v1215, 1.0
        %v1224 = vrcp.pop %v1216
        %v1225 = vmul.f32 1.0, %v1224
        %v1226 = vrcp.pop %v1217
        %v1227 = vmul.f32 1.0, %v1226
        %v1228 = vrcp.pop %v1218
        %v1229 = vmul.f32 1.0, %v1228
        %v1230 = vrcp.pop %v1219
        %v1231 = vmul.f32 1.0, %v1230
        %v1232 = vrcp.pop %v1220
        %v1233 = vmul.f32 1.0, %v1232
        %v1234 = vrcp.pop %v1221
        %v1235 = vmul.f32 1.0, %v1234
        %v1236 = vrcp.pop %v1222
        %v1237 = vmul.f32 1.0, %v1236
        %v1238 = vrcp.pop %v1223
        %v1239 = vmul.f32 1.0, %v1238
        %v1240 = vmul.f32 %v1184, %v1225
        %v1241 = vmul.f32 %v1185, %v1227
        %v1242 = vmul.f32 %v1186, %v1229
        %v1243 = vmul.f32 %v1187, %v1231
        %v1244 = vmul.f32 %v1188, %v1233
        %v1245 = vmul.f32 %v1189, %v1235
        %v1246 = vmul.f32 %v1190, %v1237
        %v1247 = vmul.f32 %v1191, %v1239
        %v1248 = vld [vmem:[%s9] sm:$0xff]
        %v1249 = vld [vmem:[%s9 + $0x8] sm:$0xff]
        %v1250 = vld [vmem:[%s9 + $0x10] sm:$0xff]
        %v1251 = vld [vmem:[%s9 + $0x18] sm:$0xff]
        %v1252 = vld [vmem:[%s10] sm:$0x1]
        %v1254 = vlaneseq
        %v1255 = vshrl.u32 %v1254, 7
        %v1256 = vsub.s32 0, %v1255
        %v1257 = vrot.slane %v1252, %v1256
        %v1260 = vsel %vm789, %v1240, 0
        %v1263 = vsel %vm789, %v1241, 0
        %v1266 = vsel %vm789, %v1242, 0
        %v1269 = vsel %vm789, %v1243, 0
        %v1272 = vsel %vm789, %v1244, 0
        %v1275 = vsel %vm789, %v1245, 0
        %v1278 = vsel %vm789, %v1246, 0
        %v1281 = vsel %vm789, %v1247, 0
        %1283 = vmatprep.subr.mxu0 0.0
        %1284 = vmatpush1.msra.mxu0 0.0
        %1285 = vmatprep.subr.mxu0 0.0
        %1286 = vmatpush1.msra.mxu0 0.0
        %1287 = vmatprep.subr.mxu0 0.0
        %1288 = vmatpush1.msra.mxu0 0.0
        %1289 = vmatprep.subr.mxu0 0.0
        %1290 = vmatpush1.msra.mxu0 0.0
        %1291 = vmatprep.subr.mxu0 0.0
        %1292 = vmatpush1.msra.mxu0 0.0
        %1293 = vmatprep.subr.mxu0 0.0
        %1294 = vmatpush1.msra.mxu0 0.0
        %1295 = vmatprep.subr.mxu0 0.0
        %1296 = vmatpush1.msra.mxu0 0.0
        %1297 = vmatprep.subr.mxu0 0.0
        %1298 = vmatpush1.msra.mxu0 0.0
        %1299 = vmatprep.subr.mxu0 0.0
        %1300 = vmatpush1.msra.mxu0 0.0
        %1301 = vmatprep.subr.mxu0 0.0
        %1302 = vmatpush1.msra.mxu0 0.0
        %1303 = vmatprep.subr.mxu0 0.0
        %1304 = vmatpush1.msra.mxu0 0.0
        %1305 = vmatprep.subr.mxu0 0.0
        %1306 = vmatpush1.msra.mxu0 0.0
        %1307 = vmatprep.subr.mxu0 0.0
        %1308 = vmatpush1.msra.mxu0 %v1251
        %1309 = vmatprep.subr.mxu0 0.0
        %1310 = vmatpush1.msra.mxu0 %v1250
        %1311 = vmatprep.subr.mxu0 0.0
        %1312 = vmatpush1.msra.mxu0 %v1249
        %1313 = vmatprep.subr.mxu0 0.0
        %1314 = vmatpush1.msra.mxu0 %v1248
        %1315 = vmatprep.subr.mxu0 0.0
        %1316 = vmatpush2.msra.mxu0 0.0
        %1317 = vmatprep.subr.mxu0 0.0
        %1318 = vmatpush2.msra.mxu0 0.0
        %1319 = vmatprep.subr.mxu0 0.0
        %1320 = vmatpush2.msra.mxu0 0.0
        %1321 = vmatprep.subr.mxu0 0.0
        %1322 = vmatpush2.msra.mxu0 0.0
        %1323 = vmatprep.subr.mxu0 0.0
        %1324 = vmatpush2.msra.mxu0 0.0
        %1325 = vmatprep.subr.mxu0 0.0
        %1326 = vmatpush2.msra.mxu0 0.0
        %1327 = vmatprep.subr.mxu0 0.0
        %1328 = vmatpush2.msra.mxu0 0.0
        %1329 = vmatprep.subr.mxu0 0.0
        %1330 = vmatpush2.msra.mxu0 0.0
        %1331 = vmatprep.subr.mxu0 0.0
        %1332 = vmatpush2.msra.mxu0 0.0
        %1333 = vmatprep.subr.mxu0 0.0
        %1334 = vmatpush2.msra.mxu0 0.0
        %1335 = vmatprep.subr.mxu0 0.0
        %1336 = vmatpush2.msra.mxu0 0.0
        %1337 = vmatprep.subr.mxu0 0.0
        %1338 = vmatpush2.msra.mxu0 0.0
        %1339 = vmatprep.subr.mxu0 0.0
        %1340 = vmatpush2.msra.mxu0 0.0
        %1341 = vmatprep.subr.mxu0 0.0
        %1342 = vmatpush2.msra.mxu0 0.0
        %1343 = vmatprep.subr.mxu0 0.0
        %1344 = vmatpush2.msra.mxu0 0.0
        %1345 = vmatprep.subr.mxu0 0.0
        %1346 = vmatpush2.msra.mxu0 0.0
        %1347 = vmatprep.mubr.f32.mxu0 0.0
        %1348 = vmatmul.mubr.f32.gmra.mxu0 %v1260
        %v1349 = vpop.f32.mrf.mxu0
        %v1350 = vadd.f32 %v1257, %v1349
        %v1351 = vpop.f32.mrf.mxu0
        %1352 = vmatprep.mubr.f32.mxu0 0.0
        %1353 = vmatmul.mubr.f32.gmra.mxu0 %v1263
        %v1354 = vpop.f32.mrf.mxu0
        %v1355 = vadd.f32 %v1257, %v1354
        %v1356 = vpop.f32.mrf.mxu0
        %1357 = vmatprep.mubr.f32.mxu0 0.0
        %1358 = vmatmul.mubr.f32.gmra.mxu0 %v1266
        %v1359 = vpop.f32.mrf.mxu0
        %v1360 = vadd.f32 %v1257, %v1359
        %v1361 = vpop.f32.mrf.mxu0
        %1362 = vmatprep.mubr.f32.mxu0 0.0
        %1363 = vmatmul.mubr.f32.gmra.mxu0 %v1269
        %v1364 = vpop.f32.mrf.mxu0
        %v1365 = vadd.f32 %v1257, %v1364
        %v1366 = vpop.f32.mrf.mxu0
        %1367 = vmatprep.mubr.f32.mxu0 0.0
        %1368 = vmatmul.mubr.f32.gmra.mxu0 %v1272
        %v1369 = vpop.f32.mrf.mxu0
        %v1370 = vadd.f32 %v1257, %v1369
        %v1371 = vpop.f32.mrf.mxu0
        %1372 = vmatprep.mubr.f32.mxu0 0.0
        %1373 = vmatmul.mubr.f32.gmra.mxu0 %v1275
        %v1374 = vpop.f32.mrf.mxu0
        %v1375 = vadd.f32 %v1257, %v1374
        %v1376 = vpop.f32.mrf.mxu0
        %1377 = vmatprep.mubr.f32.mxu0 0.0
        %1378 = vmatmul.mubr.f32.gmra.mxu0 %v1278
        %v1379 = vpop.f32.mrf.mxu0
        %v1380 = vadd.f32 %v1257, %v1379
        %v1381 = vpop.f32.mrf.mxu0
        %1382 = vmatprep.mubr.f32.mxu0 0.0
        %1383 = vmatmul.mubr.f32.gmra.mxu0 %v1281
        %v1384 = vpop.f32.mrf.mxu0
        %v1385 = vadd.f32 %v1257, %v1384
        %v1386 = vpop.f32.mrf.mxu0
        %1387 = vdwg.mxu0
        %v1388 = vxor.u32 %v1350, 2147483648
        %v1389 = vxor.u32 %v1355, 2147483648
        %v1390 = vxor.u32 %v1360, 2147483648
        %v1391 = vxor.u32 %v1365, 2147483648
        %v1392 = vxor.u32 %v1370, 2147483648
        %v1393 = vxor.u32 %v1375, 2147483648
        %v1394 = vxor.u32 %v1380, 2147483648
        %v1395 = vxor.u32 %v1385, 2147483648
        %v1396 = vmul.f32 %v1388, 1.442695
        %v1397 = vpow.pop %v1396
        %v1398 = vmul.f32 %v1389, 1.442695
        %v1399 = vpow.pop %v1398
        %v1400 = vmul.f32 %v1390, 1.442695
        %v1401 = vpow.pop %v1400
        %v1402 = vmul.f32 %v1391, 1.442695
        %v1403 = vpow.pop %v1402
        %v1404 = vmul.f32 %v1392, 1.442695
        %v1405 = vpow.pop %v1404
        %v1406 = vmul.f32 %v1393, 1.442695
        %v1407 = vpow.pop %v1406
        %v1408 = vmul.f32 %v1394, 1.442695
        %v1409 = vpow.pop %v1408
        %v1410 = vmul.f32 %v1395, 1.442695
        %v1411 = vpow.pop %v1410
        %v1412 = vadd.f32 %v1397, 1.0
        %v1413 = vadd.f32 %v1399, 1.0
        %v1414 = vadd.f32 %v1401, 1.0
        %v1415 = vadd.f32 %v1403, 1.0
        %v1416 = vadd.f32 %v1405, 1.0
        %v1417 = vadd.f32 %v1407, 1.0
        %v1418 = vadd.f32 %v1409, 1.0
        %v1419 = vadd.f32 %v1411, 1.0
        %v1420 = vrcp.pop %v1412
        %v1421 = vmul.f32 1.0, %v1420
        %v1422 = vrcp.pop %v1413
        %v1423 = vmul.f32 1.0, %v1422
        %v1424 = vrcp.pop %v1414
        %v1425 = vmul.f32 1.0, %v1424
        %v1426 = vrcp.pop %v1415
        %v1427 = vmul.f32 1.0, %v1426
        %v1428 = vrcp.pop %v1416
        %v1429 = vmul.f32 1.0, %v1428
        %v1430 = vrcp.pop %v1417
        %v1431 = vmul.f32 1.0, %v1430
        %v1432 = vrcp.pop %v1418
        %v1433 = vmul.f32 1.0, %v1432
        %v1434 = vrcp.pop %v1419
        %v1435 = vmul.f32 1.0, %v1434
        %v1436 = vmul.f32 %v1350, %v1421
        %v1437 = vmul.f32 %v1355, %v1423
        %v1438 = vmul.f32 %v1360, %v1425
        %v1439 = vmul.f32 %v1365, %v1427
        %v1440 = vmul.f32 %v1370, %v1429
        %v1441 = vmul.f32 %v1375, %v1431
        %v1442 = vmul.f32 %v1380, %v1433
        %v1443 = vmul.f32 %v1385, %v1435
        %1445 = vset.pattern.permute.xlu0 0
        %1446 = vperm.xlu0 %1445, %v783
        %v1447 = vpop.permute.xlu0 %1446
        %v1450 = vlaneseq
        %v1451 = vshrl.u32 %v1450, 7
        %v1452 = vsub.s32 0, %v1451
        %v1453 = vrot.slane %v784, %v1452
        %v1455 = vmul.f32 %v1447, %v1453
        %v1456 = vlaneseq
        %v1457 = vshrl.u32 %v1456, 7
        %v1458 = vsub.s32 0, %v1457
        %v1459 = vrot.slane %v1455, %v1458
        %1461 = vbcast.lane.b32.xlu0 %v1459, 256
        %v1462 = vpop.permute.xlu0 %1461
        %v1463 = vlaneseq
        %v1464 = vshrl.u32 %v1463, 7
        %v1465 = vsub.s32 1, %v1464
        %v1466 = vrot.slane %v1455, %v1465
        %1468 = vbcast.lane.b32.xlu0 %v1466, 256
        %v1469 = vpop.permute.xlu0 %1468
        %v1470 = vlaneseq
        %v1471 = vshrl.u32 %v1470, 7
        %v1472 = vsub.s32 2, %v1471
        %v1473 = vrot.slane %v1455, %v1472
        %1475 = vbcast.lane.b32.xlu0 %v1473, 256
        %v1476 = vpop.permute.xlu0 %1475
        %v1477 = vlaneseq
        %v1478 = vshrl.u32 %v1477, 7
        %v1479 = vsub.s32 3, %v1478
        %v1480 = vrot.slane %v1455, %v1479
        %1482 = vbcast.lane.b32.xlu0 %v1480, 256
        %v1483 = vpop.permute.xlu0 %1482
        %v1484 = vlaneseq
        %v1485 = vshrl.u32 %v1484, 7
        %v1486 = vsub.s32 4, %v1485
        %v1487 = vrot.slane %v1455, %v1486
        %1489 = vbcast.lane.b32.xlu0 %v1487, 256
        %v1490 = vpop.permute.xlu0 %1489
        %v1491 = vlaneseq
        %v1492 = vshrl.u32 %v1491, 7
        %v1493 = vsub.s32 5, %v1492
        %v1494 = vrot.slane %v1455, %v1493
        %1496 = vbcast.lane.b32.xlu0 %v1494, 256
        %v1497 = vpop.permute.xlu0 %1496
        %v1498 = vlaneseq
        %v1499 = vshrl.u32 %v1498, 7
        %v1500 = vsub.s32 6, %v1499
        %v1501 = vrot.slane %v1455, %v1500
        %1503 = vbcast.lane.b32.xlu0 %v1501, 256
        %v1504 = vpop.permute.xlu0 %1503
        %v1505 = vlaneseq
        %v1506 = vshrl.u32 %v1505, 7
        %v1507 = vsub.s32 7, %v1506
        %v1508 = vrot.slane %v1455, %v1507
        %1510 = vbcast.lane.b32.xlu0 %v1508, 256
        %v1511 = vpop.permute.xlu0 %1510
        %v1512 = vmul.f32 %v1436, %v1462
        %v1513 = vmul.f32 %v1437, %v1469
        %v1514 = vmul.f32 %v1438, %v1476
        %v1515 = vmul.f32 %v1439, %v1483
        %v1516 = vmul.f32 %v1440, %v1490
        %v1517 = vmul.f32 %v1441, %v1497
        %v1518 = vmul.f32 %v1442, %v1504
        %v1519 = vmul.f32 %v1443, %v1511
        %v1520 = vsel %vm789, %v1512, 0.0
        %v1521 = vrot.slane %v1520, 4
        %v1522 = vadd.f32 %v1520, %v1521
        %v1523 = vrot.slane %v1522, 2
        %v1524 = vadd.f32 %v1522, %v1523
        %v1525 = vrot.slane %v1524, 1
        %v1526 = vadd.f32 %v1524, %v1525
        %v1527 = vsel %vm789, %v1513, 0.0
        %v1528 = vrot.slane %v1527, 4
        %v1529 = vadd.f32 %v1527, %v1528
        %v1530 = vrot.slane %v1529, 2
        %v1531 = vadd.f32 %v1529, %v1530
        %v1532 = vrot.slane %v1531, 1
        %v1533 = vadd.f32 %v1531, %v1532
        %v1534 = vsel %vm789, %v1514, 0.0
        %v1535 = vrot.slane %v1534, 4
        %v1536 = vadd.f32 %v1534, %v1535
        %v1537 = vrot.slane %v1536, 2
        %v1538 = vadd.f32 %v1536, %v1537
        %v1539 = vrot.slane %v1538, 1
        %v1540 = vadd.f32 %v1538, %v1539
        %v1541 = vsel %vm789, %v1515, 0.0
        %v1542 = vrot.slane %v1541, 4
        %v1543 = vadd.f32 %v1541, %v1542
        %v1544 = vrot.slane %v1543, 2
        %v1545 = vadd.f32 %v1543, %v1544
        %v1546 = vrot.slane %v1545, 1
        %v1547 = vadd.f32 %v1545, %v1546
        %v1548 = vsel %vm789, %v1516, 0.0
        %v1549 = vrot.slane %v1548, 4
        %v1550 = vadd.f32 %v1548, %v1549
        %v1551 = vrot.slane %v1550, 2
        %v1552 = vadd.f32 %v1550, %v1551
        %v1553 = vrot.slane %v1552, 1
        %v1554 = vadd.f32 %v1552, %v1553
        %v1555 = vsel %vm789, %v1517, 0.0
        %v1556 = vrot.slane %v1555, 4
        %v1557 = vadd.f32 %v1555, %v1556
        %v1558 = vrot.slane %v1557, 2
        %v1559 = vadd.f32 %v1557, %v1558
        %v1560 = vrot.slane %v1559, 1
        %v1561 = vadd.f32 %v1559, %v1560
        %v1562 = vsel %vm789, %v1518, 0.0
        %v1563 = vrot.slane %v1562, 4
        %v1564 = vadd.f32 %v1562, %v1563
        %v1565 = vrot.slane %v1564, 2
        %v1566 = vadd.f32 %v1564, %v1565
        %v1567 = vrot.slane %v1566, 1
        %v1568 = vadd.f32 %v1566, %v1567
        %v1569 = vsel %vm789, %v1519, 0.0
        %v1570 = vrot.slane %v1569, 4
        %v1571 = vadd.f32 %v1569, %v1570
        %v1572 = vrot.slane %v1571, 2
        %v1573 = vadd.f32 %v1571, %v1572
        %v1574 = vrot.slane %v1573, 1
        %v1575 = vadd.f32 %v1573, %v1574
        %v1576 = vmul.f32 %v774, %v1447
        %v1577 = vrot.slane %v1447, 1
        %v1578 = vrot.slane %v1447, 2
        %v1579 = vrot.slane %v1447, 3
        %v1580 = vrot.slane %v1447, 4
        %v1581 = vrot.slane %v1447, 5
        %v1582 = vrot.slane %v1447, 6
        %v1583 = vrot.slane %v1447, 7
        %v1591 = vmul.f32 %v1526, %v1447
        %v1592 = vmul.f32 %v1533, %v1577
        %v1593 = vmul.f32 %v1540, %v1578
        %v1594 = vmul.f32 %v1547, %v1579
        %v1595 = vmul.f32 %v1554, %v1580
        %v1596 = vmul.f32 %v1561, %v1581
        %v1597 = vmul.f32 %v1568, %v1582
        %v1598 = vmul.f32 %v1575, %v1583
        %v1599 = vld [vmem:[#allocation14] sm:$0xff]
        %v1600 = vld [vmem:[#allocation14 + $0x8] sm:$0xff]
        %v1601 = vld [vmem:[#allocation14 + $0x10] sm:$0xff]
        %v1602 = vld [vmem:[#allocation14 + $0x18] sm:$0xff]
        %v1603 = vld [vmem:[#allocation16] sm:$0xff]
        %v1604 = vld [vmem:[#allocation16 + $0x8] sm:$0xff]
        %v1605 = vld [vmem:[#allocation16 + $0x10] sm:$0xff]
        %v1606 = vld [vmem:[#allocation16 + $0x18] sm:$0xff]
        %v1615 = vrot.slane %v1592, 7
        %vm1616 = vcmask 1041409
        %v1617 = vsel %vm1616, %v1615, %v1591
        %v1618 = vrot.slane %v1593, 6
        %vm1619 = vcmask 1042434
        %v1620 = vsel %vm1619, %v1618, %v1617
        %v1621 = vrot.slane %v1594, 5
        %vm1622 = vcmask 1043459
        %v1623 = vsel %vm1622, %v1621, %v1620
        %v1624 = vrot.slane %v1595, 4
        %vm1625 = vcmask 1044484
        %v1626 = vsel %vm1625, %v1624, %v1623
        %v1627 = vrot.slane %v1596, 3
        %vm1628 = vcmask 1045509
        %v1629 = vsel %vm1628, %v1627, %v1626
        %v1630 = vrot.slane %v1597, 2
        %vm1631 = vcmask 1046534
        %v1632 = vsel %vm1631, %v1630, %v1629
        %v1633 = vrot.slane %v1598, 1
        %vm1634 = vcmask 1047559
        %v1635 = vsel %vm1634, %v1633, %v1632
        %v1636 = vsel %vm789, %v1635, 0
        %1638 = vmatprep.subr.mxu0 0.0
        %1639 = vmatpush1.msra.mxu0 0.0
        %1640 = vmatprep.subr.mxu0 0.0
        %1641 = vmatpush1.msra.mxu0 0.0
        %1642 = vmatprep.subr.mxu0 0.0
        %1643 = vmatpush1.msra.mxu0 0.0
        %1644 = vmatprep.subr.mxu0 0.0
        %1645 = vmatpush1.msra.mxu0 0.0
        %1646 = vmatprep.subr.mxu0 0.0
        %1647 = vmatpush1.msra.mxu0 0.0
        %1648 = vmatprep.subr.mxu0 0.0
        %1649 = vmatpush1.msra.mxu0 0.0
        %1650 = vmatprep.subr.mxu0 0.0
        %1651 = vmatpush1.msra.mxu0 0.0
        %1652 = vmatprep.subr.mxu0 0.0
        %1653 = vmatpush1.msra.mxu0 0.0
        %1654 = vmatprep.subr.mxu0 0.0
        %1655 = vmatpush1.msra.mxu0 0.0
        %1656 = vmatprep.subr.mxu0 0.0
        %1657 = vmatpush1.msra.mxu0 0.0
        %1658 = vmatprep.subr.mxu0 0.0
        %1659 = vmatpush1.msra.mxu0 0.0
        %1660 = vmatprep.subr.mxu0 0.0
        %1661 = vmatpush1.msra.mxu0 0.0
        %1662 = vmatprep.subr.mxu0 0.0
        %1663 = vmatpush1.msra.mxu0 %v1606
        %1664 = vmatprep.subr.mxu0 0.0
        %1665 = vmatpush1.msra.mxu0 %v1605
        %1666 = vmatprep.subr.mxu0 0.0
        %1667 = vmatpush1.msra.mxu0 %v1604
        %1668 = vmatprep.subr.mxu0 0.0
        %1669 = vmatpush1.msra.mxu0 %v1603
        %1670 = vmatprep.subr.mxu0 0.0
        %1671 = vmatpush2.msra.mxu0 0.0
        %1672 = vmatprep.subr.mxu0 0.0
        %1673 = vmatpush2.msra.mxu0 0.0
        %1674 = vmatprep.subr.mxu0 0.0
        %1675 = vmatpush2.msra.mxu0 0.0
        %1676 = vmatprep.subr.mxu0 0.0
        %1677 = vmatpush2.msra.mxu0 0.0
        %1678 = vmatprep.subr.mxu0 0.0
        %1679 = vmatpush2.msra.mxu0 0.0
        %1680 = vmatprep.subr.mxu0 0.0
        %1681 = vmatpush2.msra.mxu0 0.0
        %1682 = vmatprep.subr.mxu0 0.0
        %1683 = vmatpush2.msra.mxu0 0.0
        %1684 = vmatprep.subr.mxu0 0.0
        %1685 = vmatpush2.msra.mxu0 0.0
        %1686 = vmatprep.subr.mxu0 0.0
        %1687 = vmatpush2.msra.mxu0 0.0
        %1688 = vmatprep.subr.mxu0 0.0
        %1689 = vmatpush2.msra.mxu0 0.0
        %1690 = vmatprep.subr.mxu0 0.0
        %1691 = vmatpush2.msra.mxu0 0.0
        %1692 = vmatprep.subr.mxu0 0.0
        %1693 = vmatpush2.msra.mxu0 0.0
        %1694 = vmatprep.subr.mxu0 0.0
        %1695 = vmatpush2.msra.mxu0 0.0
        %1696 = vmatprep.subr.mxu0 0.0
        %1697 = vmatpush2.msra.mxu0 0.0
        %1698 = vmatprep.subr.mxu0 0.0
        %1699 = vmatpush2.msra.mxu0 0.0
        %1700 = vmatprep.subr.mxu0 0.0
        %1701 = vmatpush2.msra.mxu0 0.0
        %1702 = vmatprep.mubr.f32.mxu0 0.0
        %1703 = vmatmul.mubr.f32.gmra.mxu0 %v1636
        %v1704 = vpop.f32.mrf.mxu0
        %v1705 = vadd.f32 0.0, %v1704
        %v1706 = vpop.f32.mrf.mxu0
        %1707 = vdwg.mxu0
        %v1709 = vsel %vm789, %v1576, 0
        %1711 = vmatprep.subr.mxu0 0.0
        %1712 = vmatpush1.msra.mxu0 0.0
        %1713 = vmatprep.subr.mxu0 0.0
        %1714 = vmatpush1.msra.mxu0 0.0
        %1715 = vmatprep.subr.mxu0 0.0
        %1716 = vmatpush1.msra.mxu0 0.0
        %1717 = vmatprep.subr.mxu0 0.0
        %1718 = vmatpush1.msra.mxu0 0.0
        %1719 = vmatprep.subr.mxu0 0.0
        %1720 = vmatpush1.msra.mxu0 0.0
        %1721 = vmatprep.subr.mxu0 0.0
        %1722 = vmatpush1.msra.mxu0 0.0
        %1723 = vmatprep.subr.mxu0 0.0
        %1724 = vmatpush1.msra.mxu0 0.0
        %1725 = vmatprep.subr.mxu0 0.0
        %1726 = vmatpush1.msra.mxu0 0.0
        %1727 = vmatprep.subr.mxu0 0.0
        %1728 = vmatpush1.msra.mxu0 0.0
        %1729 = vmatprep.subr.mxu0 0.0
        %1730 = vmatpush1.msra.mxu0 0.0
        %1731 = vmatprep.subr.mxu0 0.0
        %1732 = vmatpush1.msra.mxu0 0.0
        %1733 = vmatprep.subr.mxu0 0.0
        %1734 = vmatpush1.msra.mxu0 0.0
        %1735 = vmatprep.subr.mxu0 0.0
        %1736 = vmatpush1.msra.mxu0 %v1602
        %1737 = vmatprep.subr.mxu0 0.0
        %1738 = vmatpush1.msra.mxu0 %v1601
        %1739 = vmatprep.subr.mxu0 0.0
        %1740 = vmatpush1.msra.mxu0 %v1600
        %1741 = vmatprep.subr.mxu0 0.0
        %1742 = vmatpush1.msra.mxu0 %v1599
        %1743 = vmatprep.subr.mxu0 0.0
        %1744 = vmatpush2.msra.mxu0 0.0
        %1745 = vmatprep.subr.mxu0 0.0
        %1746 = vmatpush2.msra.mxu0 0.0
        %1747 = vmatprep.subr.mxu0 0.0
        %1748 = vmatpush2.msra.mxu0 0.0
        %1749 = vmatprep.subr.mxu0 0.0
        %1750 = vmatpush2.msra.mxu0 0.0
        %1751 = vmatprep.subr.mxu0 0.0
        %1752 = vmatpush2.msra.mxu0 0.0
        %1753 = vmatprep.subr.mxu0 0.0
        %1754 = vmatpush2.msra.mxu0 0.0
        %1755 = vmatprep.subr.mxu0 0.0
        %1756 = vmatpush2.msra.mxu0 0.0
        %1757 = vmatprep.subr.mxu0 0.0
        %1758 = vmatpush2.msra.mxu0 0.0
        %1759 = vmatprep.subr.mxu0 0.0
        %1760 = vmatpush2.msra.mxu0 0.0
        %1761 = vmatprep.subr.mxu0 0.0
        %1762 = vmatpush2.msra.mxu0 0.0
        %1763 = vmatprep.subr.mxu0 0.0
        %1764 = vmatpush2.msra.mxu0 0.0
        %1765 = vmatprep.subr.mxu0 0.0
        %1766 = vmatpush2.msra.mxu0 0.0
        %1767 = vmatprep.subr.mxu0 0.0
        %1768 = vmatpush2.msra.mxu0 0.0
        %1769 = vmatprep.subr.mxu0 0.0
        %1770 = vmatpush2.msra.mxu0 0.0
        %1771 = vmatprep.subr.mxu0 0.0
        %1772 = vmatpush2.msra.mxu0 0.0
        %1773 = vmatprep.subr.mxu0 0.0
        %1774 = vmatpush2.msra.mxu0 0.0
        %1775 = vmatprep.mubr.f32.mxu0 0.0
        %1776 = vmatmul.mubr.f32.gmra.mxu0 %v1709
        %v1777 = vpop.f32.mrf.mxu0
        %v1778 = vadd.f32 %v1705, %v1777
        %v1779 = vpop.f32.mrf.mxu0
        %1780 = vdwg.mxu0
        %v1781 = vld [vmem:[%s13] sm:$0x1]
        %v1783 = vlaneseq
        %v1784 = vshrl.u32 %v1783, 7
        %v1785 = vsub.s32 0, %v1784
        %v1786 = vrot.slane %v1781, %v1785
        %v1788 = vadd.f32 %v1778, %v1786
        %v1789 = vxor.u32 %v1788, 2147483648
        %v1790 = vmul.f32 %v1789, 1.442695
        %v1791 = vpow.pop %v1790
        %v1792 = vadd.f32 %v1791, 1.0
        %v1793 = vrcp.pop %v1792
        %v1794 = vmul.f32 1.0, %v1793
        %v1795 = vmul.f32 %v1788, %v1794
        %v1796 = vld [vmem:[#allocation17] sm:$0xff]
        %v1797 = vld [vmem:[#allocation17 + $0x8] sm:$0xff]
        %v1798 = vld [vmem:[#allocation17 + $0x10] sm:$0xff]
        %v1799 = vld [vmem:[#allocation17 + $0x18] sm:$0xff]
        %v1800 = vld [vmem:[%s15] sm:$0x1]
        %v1802 = vlaneseq
        %v1803 = vshrl.u32 %v1802, 7
        %v1804 = vsub.s32 0, %v1803
        %v1805 = vrot.slane %v1800, %v1804
        %v1808 = vsel %vm789, %v1795, 0
        %1810 = vmatprep.subr.mxu0 0.0
        %1811 = vmatpush1.msra.mxu0 0.0
        %1812 = vmatprep.subr.mxu0 0.0
        %1813 = vmatpush1.msra.mxu0 0.0
        %1814 = vmatprep.subr.mxu0 0.0
        %1815 = vmatpush1.msra.mxu0 0.0
        %1816 = vmatprep.subr.mxu0 0.0
        %1817 = vmatpush1.msra.mxu0 0.0
        %1818 = vmatprep.subr.mxu0 0.0
        %1819 = vmatpush1.msra.mxu0 0.0
        %1820 = vmatprep.subr.mxu0 0.0
        %1821 = vmatpush1.msra.mxu0 0.0
        %1822 = vmatprep.subr.mxu0 0.0
        %1823 = vmatpush1.msra.mxu0 0.0
        %1824 = vmatprep.subr.mxu0 0.0
        %1825 = vmatpush1.msra.mxu0 0.0
        %1826 = vmatprep.subr.mxu0 0.0
        %1827 = vmatpush1.msra.mxu0 0.0
        %1828 = vmatprep.subr.mxu0 0.0
        %1829 = vmatpush1.msra.mxu0 0.0
        %1830 = vmatprep.subr.mxu0 0.0
        %1831 = vmatpush1.msra.mxu0 0.0
        %1832 = vmatprep.subr.mxu0 0.0
        %1833 = vmatpush1.msra.mxu0 0.0
        %1834 = vmatprep.subr.mxu0 0.0
        %1835 = vmatpush1.msra.mxu0 %v1799
        %1836 = vmatprep.subr.mxu0 0.0
        %1837 = vmatpush1.msra.mxu0 %v1798
        %1838 = vmatprep.subr.mxu0 0.0
        %1839 = vmatpush1.msra.mxu0 %v1797
        %1840 = vmatprep.subr.mxu0 0.0
        %1841 = vmatpush1.msra.mxu0 %v1796
        %1842 = vmatprep.subr.mxu0 0.0
        %1843 = vmatpush2.msra.mxu0 0.0
        %1844 = vmatprep.subr.mxu0 0.0
        %1845 = vmatpush2.msra.mxu0 0.0
        %1846 = vmatprep.subr.mxu0 0.0
        %1847 = vmatpush2.msra.mxu0 0.0
        %1848 = vmatprep.subr.mxu0 0.0
        %1849 = vmatpush2.msra.mxu0 0.0
        %1850 = vmatprep.subr.mxu0 0.0
        %1851 = vmatpush2.msra.mxu0 0.0
        %1852 = vmatprep.subr.mxu0 0.0
        %1853 = vmatpush2.msra.mxu0 0.0
        %1854 = vmatprep.subr.mxu0 0.0
        %1855 = vmatpush2.msra.mxu0 0.0
        %1856 = vmatprep.subr.mxu0 0.0
        %1857 = vmatpush2.msra.mxu0 0.0
        %1858 = vmatprep.subr.mxu0 0.0
        %1859 = vmatpush2.msra.mxu0 0.0
        %1860 = vmatprep.subr.mxu0 0.0
        %1861 = vmatpush2.msra.mxu0 0.0
        %1862 = vmatprep.subr.mxu0 0.0
        %1863 = vmatpush2.msra.mxu0 0.0
        %1864 = vmatprep.subr.mxu0 0.0
        %1865 = vmatpush2.msra.mxu0 0.0
        %1866 = vmatprep.subr.mxu0 0.0
        %1867 = vmatpush2.msra.mxu0 0.0
        %1868 = vmatprep.subr.mxu0 0.0
        %1869 = vmatpush2.msra.mxu0 0.0
        %1870 = vmatprep.subr.mxu0 0.0
        %1871 = vmatpush2.msra.mxu0 0.0
        %1872 = vmatprep.subr.mxu0 0.0
        %1873 = vmatpush2.msra.mxu0 0.0
        %1874 = vmatprep.mubr.f32.mxu0 0.0
        %1875 = vmatmul.mubr.f32.gmra.mxu0 %v1808
        %v1876 = vpop.f32.mrf.mxu0
        %v1877 = vadd.f32 %v1805, %v1876
        %v1878 = vpop.f32.mrf.mxu0
        %1879 = vdwg.mxu0
        %v1880 = vadd.f32 %v774, %v1877
        %v1881 = vmul.f32 %v1880, %v1447
        %1882 = vst.msk [vmem:[%s761] sm:$0xff] %vm789, %v1881
        %s1883 = sand.u32 %s429, 1
        %s1884 = scalar_lea.sflag [#allocation4], %s1883
        %s1885 = sand.u32 %s429, 1
        %s1886 = smul.addr %s1885, 8
        %s1887 = scalar_lea.vmem [#allocation19], %s1886
        // Predicated region
        $region125: #{tpu_custom_call.1} parent=83 // pred_check
          %p1888 = pneg %p439
        $region126: #{tpu_custom_call.1} parent=83 // pred_check_branch
          %1890 = sbr.rel (%p1888) target = $region128
        $region127: #{tpu_custom_call.1} parent=83 // pred_region
          %s1892 = ssub.s32 128, 128
          %1893 = vsyncadd %s1884, %s1892
          %s1894 = sadd.s32 %s45, %s44
          %s1895 = smul.addr %s1894, 128
          %s1896 = scalar_lea.hbm %s16, %s1895
          %s1898 = sshll.u32 %s1887, 4
          %s1899 = int_to_ptr.vmem [resolvable:$true] %s1898
          %1901 = dma.vmem_to_hbm [thread:$0]  %s1899, 128, %s1896, %s1884
        $region128: #{tpu_custom_call.1} parent=83 // pred_fallthru
          _
      $region84: #{tpu_custom_call.1} parent=5 // pred_fallthru
        _
      %p1902 = scmp.le.s32.totalorder 2, %s35
      // Predicated region
      $region129: #{tpu_custom_call.1} parent=5 // pred_check
        %p1903 = pneg %p1902
      $region130: #{tpu_custom_call.1} parent=5 // pred_check_branch
        %1905 = sbr.rel (%p1903) target = $region132
      $region131: #{tpu_custom_call.1} parent=5 // pred_region
        %s1906 = ssub.s32 %s35, 2
        // Predicated region
        $region133: #{tpu_custom_call.1} parent=131 // pred_check
          %p1907 = pneg %p445
        $region134: #{tpu_custom_call.1} parent=131 // pred_check_branch
          %1909 = sbr.rel (%p1907) target = $region136
        $region135: #{tpu_custom_call.1} parent=131 // pred_region
          %s1910 = sand.u32 %s430, 1
          %s1911 = scalar_lea.sflag [#allocation4], %s1910
          %s1912 = sand.u32 %s430, 1
          %s1913 = smul.addr %s1912, 8
          %s1914 = scalar_lea.vmem [#allocation19], %s1913
          %1915 = dma.done %s1911, 128
        $region136: #{tpu_custom_call.1} parent=131 // pred_fallthru
          _
      $region132: #{tpu_custom_call.1} parent=5 // pred_fallthru
        _
    $region6: #{tpu_custom_call.1} parent=1 // loop_footer
      %s39 = sadd.s32 1, %s35
    $region7: #{tpu_custom_call.1} parent=1 // loop_footer_branch
      %34 = sbr.rel target = $region3
    $region8: #{tpu_custom_call.1} parent=1 // loop_exit
      _
    %1916 = vsyncpa [#allocation3], 1
    %s1917 = scalar_lea.sflag [#allocation3], 1
    %1918 = vsyncpa %s1917, 1
    %1919 = vsyncpa [#allocation6], 1
    %s1920 = scalar_lea.sflag [#allocation6], 1
    %1921 = vsyncpa %s1920, 1
    %1922 = vsyncpa [#allocation9], 1
    %1923 = vsyncpa [#allocation12], 1
    %1924 = vsyncpa [#allocation15], 1
    %1925 = vsyncpa [#allocation18], 1
    %1926 = vsyncpa [#allocation4], 1
    %s1927 = scalar_lea.sflag [#allocation4], 1
    %1928 = vsyncpa %s1927, 1

</llo_original>
